<compile_context>
chip_gen: v5e
topology: v5e:2x2
jax: 0.10.0
libtpu: 0.0.40
codegen_flags: <defaults>
</compile_context>

<pallas_src>
import functools

import numpy as np
import jax
import jax.numpy as jnp
from jax import lax
from jax.experimental import pallas as pl
from jax.experimental.pallas import tpu as pltpu

# ---------------- module configuration (matches the PyTorch module) ----------------
B_SZ, C_SZ, N_SZ, H_SZ, W_SZ = 2, 2, 4, 4, 8
D_MODEL = H_SZ * W_SZ                 # hidden_dim = 32
L_SEQ = C_SZ * N_SZ                   # sequence length = 8
D_STATE = 16
EXPAND = 0.5
D_INNER = int(EXPAND * D_MODEL)       # 16
DT_RANK = -(-D_MODEL // 16)           # ceil(32/16) = 2
K_DIR = 2                             # forward + reverse scan


def _softplus(x):
    # matches torch.nn.functional.softplus (beta=1, threshold=20)
    return jnp.where(x > 20.0, x, jnp.log1p(jnp.exp(x)))


# ---------------- fused Pallas kernel (all batches in one invocation) ----------------
def _spec_mamba_kernel(x_ref, g1_ref, b1_ref, win_ref, wproj_ref, permt_ref,
                       wbc_ref, wdt_ref, dtb_ref, arep_ref, revm_ref, jf_ref,
                       s_ref, dsum_ref, g2_ref, b2_ref, wout_ref,
                       o_ref, da_scr, dbu_scr, cc_scr, *,
                       seq_len, d_inner, d_state, n_dir, n_batch):
    f32 = jnp.float32
    L, Din, Nst, K, B = seq_len, d_inner, d_state, n_dir, n_batch
    KD = K * Din           # 32
    BKD = B * KD           # 64 lanes: [b0:fwd,rev | b1:fwd,rev]
    KBL = K * B * L        # 32
    g = Din // L           # groups of the torch `.view` reinterpretation

    x_raw = x_ref[...]                                                  # (B*L, D)

    # ----- ln_1 (eps = 1e-6) -----
    mu = jnp.mean(x_raw, axis=-1, keepdims=True)
    xc = x_raw - mu
    var = jnp.mean(xc * xc, axis=-1, keepdims=True)
    x = xc * lax.rsqrt(var + 1e-6) * g1_ref[...] + b1_ref[...]

    # ----- in_proj -> (x, z); proj + SiLU -----
    xz = jnp.dot(x, win_ref[...], preferred_element_type=f32)           # (B*L, 2*Din)
    xp = xz[:, :Din]
    z = xz[:, Din:]
    xp = jnp.dot(xp, wproj_ref[...], preferred_element_type=f32)        # (B*L, Din)
    xp = xp * jax.nn.sigmoid(xp)

    # ----- torch `.view(B, -1, L)` raw reinterpretation; batches lane-stacked -----
    m_cols = []
    for b in range(B):
        xpb = xp[b * L:(b + 1) * L, :]                                   # (L, Din)
        m_cols.append(jnp.concatenate([xpb[:, j * L:(j + 1) * L] for j in range(g)],
                                      axis=0))                           # (Din, L)
    m_all = jnp.concatenate(m_cols, axis=1)                              # (Din, B*L)

    # ----- per-token scan features (perm folded into wbc; one transpose total) -----
    bc_f = jnp.dot(wbc_ref[...], m_all, preferred_element_type=f32)      # (2*K*Nst, B*L): [Bk0,Bk1,Ck0,Ck1]
    xv_tok = jnp.dot(jnp.transpose(m_all), permt_ref[...],
                     preferred_element_type=f32)                         # (B*L, Din) token-major u
    dt_tok = jnp.dot(xv_tok, wdt_ref[...], preferred_element_type=f32)   # (B*L, K*Din)
    delta_tok = _softplus(dt_tok + dtb_ref[...])                         # (B*L, K*Din)

    # ----- lane-stacked layouts: lanes = b*KD + k*Din + d -----
    bc_bn = jnp.concatenate([bc_f[k * Nst:(k + 1) * Nst, :] for k in range(K)],
                            axis=1)                                      # (Nst, K*B*L)
    bc_cn = jnp.concatenate([bc_f[(K + k) * Nst:(K + k + 1) * Nst, :] for k in range(K)],
                            axis=1)                                      # (Nst, K*B*L)
    bc_n = jnp.concatenate([bc_bn, bc_cn], axis=0)                       # (2*Nst, K*B*L)

    delta_stack = jnp.concatenate([delta_tok[b * L:(b + 1) * L, :] for b in range(B)],
                                  axis=1)                                # (L, BKD)
    u_stack = jnp.concatenate([xv_tok[b * L:(b + 1) * L, :]
                               for b in range(B) for _ in range(K)], axis=1)  # (L, BKD)
    du_stack = delta_stack * u_stack

    # pre-align the reverse direction ONCE (constant row-flip matmul + lane-mask blend)
    jf = jf_ref[...]                                                     # (L, L) anti-identity
    rm = revm_ref[...]                                                   # (1, BKD): 1.0 on reverse lanes
    delta_flip = jnp.dot(jf, delta_stack, preferred_element_type=f32)
    du_flip = jnp.dot(jf, du_stack, preferred_element_type=f32)
    delta_al = delta_stack + rm * (delta_flip - delta_stack)             # (L, BKD)
    du_al = du_stack + rm * (du_flip - du_stack)                         # (L, BKD)

    # ----- hoist ALL per-step scan operands off the recurrence chain (VMEM staged) -----
    a_rep = arep_ref[...]                                                # (Nst, BKD)
    for t in range(L):
        s_t = s_ref[pl.ds(t * KBL, KBL), :]                              # (K*B*L, BKD) constant selector
        bc_t = jnp.dot(bc_n, s_t, preferred_element_type=f32)            # (2*Nst, BKD): [B bcast; C bcast]
        da_scr[pl.ds(t * Nst, Nst), :] = jnp.exp(delta_al[t:t + 1, :] * a_rep)
        dbu_scr[pl.ds(t * Nst, Nst), :] = bc_t[:Nst, :] * du_al[t:t + 1, :]
        cc_scr[pl.ds(t * Nst, Nst), :] = bc_t[Nst:, :]

    # ----- selective scan: one (Nst, BKD) mul-add per step, both dirs & batches at once -----
    h = jnp.zeros((Nst, BKD), f32)
    ystep = []
    for t in range(L):
        h = da_scr[pl.ds(t * Nst, Nst), :] * h + dbu_scr[pl.ds(t * Nst, Nst), :]
        ystep.append(jnp.sum(h * cc_scr[pl.ds(t * Nst, Nst), :], axis=0, keepdims=True))

    # ----- merge directions (one row-flip matmul) and un-stack batches -----
    y_all = jnp.concatenate(ystep, axis=0)                               # (L, BKD), scan-step order
    y_flip = jnp.dot(jf, y_all, preferred_element_type=f32)              # rows reversed
    parts = []
    for b in range(B):
        base = b * KD
        parts.append(y_all[:, base:base + Din] + y_flip[:, base + Din:base + 2 * Din])
    y_tok = jnp.concatenate(parts, axis=0)                               # (B*L, Din)
    y_tok = y_tok + dsum_ref[...] * xv_tok                               # + (D_fwd + D_rev) * u

    # ----- out_norm (eps = 1e-5), SiLU(z) gate, out_proj, residual -----
    mu2 = jnp.mean(y_tok, axis=-1, keepdims=True)
    yc2 = y_tok - mu2
    var2 = jnp.mean(yc2 * yc2, axis=-1, keepdims=True)
    y_ln = yc2 * lax.rsqrt(var2 + 1e-5) * g2_ref[...] + b2_ref[...]
    y_g = y_ln * (z * jax.nn.sigmoid(z))
    o_ref[...] = jnp.dot(y_g, wout_ref[...], preferred_element_type=f32) + x_raw


# ---------------- one-time parameter preparation (outside jit) ----------------
def prepare_params(p):
    K, Din, Nst, R, D, L, B = K_DIR, D_INNER, D_STATE, DT_RANK, D_MODEL, L_SEQ, B_SZ
    # TODO(synk): the view-permutation construction assumes d_inner % seq_len == 0
    # (true here: 16 % 8 == 0); other configs would need a general reshape path.
    assert Din % L == 0
    f32 = jnp.float32
    KD = K * Din
    BKD = B * KD

    wx = p['x_proj_w'].astype(f32)        # (K, R + 2*Nst, Din)
    wdt = p['dt_projs_w'].astype(f32)     # (K, Din, R)

    # compose dt_proj o x_proj_dt into one (Din, Din) map per direction
    wdt_eff = [wdt[k] @ wx[k][:R, :] for k in range(K)]
    w_dt_t = jnp.concatenate([w.T for w in wdt_eff], axis=1)             # (Din, K*Din)
    w_bc = jnp.concatenate([wx[k][R:R + Nst, :] for k in range(K)]
                           + [wx[k][R + Nst:, :] for k in range(K)],
                           axis=0)                                       # (2*K*Nst, Din)

    # permutation realizing the torch `.view(B, -1, L)` reinterpretation
    g = Din // L
    d_idx = np.arange(Din)
    perm = np.zeros((Din, Din), np.float32)
    perm[d_idx, (d_idx % g) * L + d_idx // g] = 1.0
    perm = jnp.asarray(perm)
    w_bc_p = w_bc @ perm                                                 # fold perm into B/C weights
    perm_t = perm.T

    a_full = -jnp.exp(p['A_logs'].astype(f32))                           # (K*Din, Nst)
    a_dir = jnp.concatenate([a_full[k * Din:(k + 1) * Din, :].T
                             for k in range(K)], axis=1)                 # (Nst, K*Din)
    a_rep = jnp.tile(a_dir, (1, B))                                      # (Nst, B*K*Din)

    dt_bias = p['dt_projs_b'].astype(f32).reshape(1, K * Din)
    dsum = jnp.sum(p['Ds'].astype(f32).reshape(K, Din), axis=0).reshape(1, Din)

    # reverse-direction lane mask, row-flip matrix, per-step B/C broadcast selectors
    rm = np.zeros((1, BKD), np.float32)
    for b in range(B):
        rm[0, b * KD + Din:(b + 1) * KD] = 1.0
    jflip = np.eye(L, dtype=np.float32)[::-1].copy()

    S = np.zeros((L, K * B * L, BKD), np.float32)
    for t in range(L):
        for k in range(K):
            pos = t if k == 0 else L - 1 - t
            for b in range(B):
                src = k * (B * L) + b * L + pos
                dst = b * KD + k * Din
                S[t, src, dst:dst + Din] = 1.0
    s_stack = S.reshape(L * K * B * L, BKD)

    return {
        'ln1_g': p['ln1_g'].astype(f32).reshape(1, D),
        'ln1_b': p['ln1_b'].astype(f32).reshape(1, D),
        'w_in_t': p['in_proj_w'].astype(f32).T,       # (D, 2*Din)
        'w_proj_t': p['proj_w'].astype(f32).T,        # (Din, Din)
        'perm_t': perm_t,                             # (Din, Din)
        'w_bc_p': w_bc_p,                             # (2*K*Nst, Din)
        'w_dt_t': w_dt_t,                             # (Din, K*Din)
        'dt_bias': dt_bias,                           # (1, K*Din)
        'a_rep': a_rep,                               # (Nst, B*K*Din)
        'rev_mask': jnp.asarray(rm),                  # (1, B*K*Din)
        'jflip': jnp.asarray(jflip),                  # (L, L)
        's_stack': jnp.asarray(s_stack),              # (L*K*B*L, B*K*Din)
        'dsum': dsum,                                 # (1, Din)
        'outnorm_g': p['outnorm_g'].astype(f32).reshape(1, Din),
        'outnorm_b': p['outnorm_b'].astype(f32).reshape(1, Din),
        'w_out_t': p['out_proj_w'].astype(f32).T,     # (Din, D)
    }


# ---------------- forward (single fused pallas_call + 2 reshapes) ----------------
@jax.jit
def spec_mamba_block_forward(inp, prep):
    Bb, Cc, Nn, Hh, Ww = inp.shape
    D = Hh * Ww
    L = Cc * Nn
    BKD = Bb * K_DIR * D_INNER
    x2d = inp.reshape(Bb * L, D).astype(jnp.float32)

    kern = functools.partial(_spec_mamba_kernel, seq_len=L, d_inner=D_INNER,
                             d_state=D_STATE, n_dir=K_DIR, n_batch=Bb)
    full = lambda i: (0, 0)
    # Batch folded into one grid step: on single-TC v5e/v6e this removes the serial
    # per-batch pipeline overhead.  (On v7x a grid=(B,) "parallel" variant could shard
    # the 2 batches over 2 TCs; at this size the folded version is expected to win.)
    out2d = pl.pallas_call(
        kern,
        out_shape=jax.ShapeDtypeStruct((Bb * L, D), jnp.float32),
        grid=(1,),
        in_specs=[
            pl.BlockSpec((Bb * L, D), full),                           # x (all batches)
            pl.BlockSpec((1, D), full),                                # ln1 gamma
            pl.BlockSpec((1, D), full),                                # ln1 beta
            pl.BlockSpec((D, 2 * D_INNER), full),                      # in_proj^T
            pl.BlockSpec((D_INNER, D_INNER), full),                    # proj^T
            pl.BlockSpec((D_INNER, D_INNER), full),                    # view permutation^T
            pl.BlockSpec((2 * K_DIR * D_STATE, D_INNER), full),        # B/C projection (perm folded)
            pl.BlockSpec((D_INNER, K_DIR * D_INNER), full),            # composed dt map
            pl.BlockSpec((1, K_DIR * D_INNER), full),                  # dt bias
            pl.BlockSpec((D_STATE, BKD), full),                        # A^T, dirs+batches lane-stacked
            pl.BlockSpec((1, BKD), full),                              # reverse-lane mask
            pl.BlockSpec((L, L), full),                                # row-flip matrix
            pl.BlockSpec((L * K_DIR * Bb * L, BKD), full),             # per-step B/C selectors
            pl.BlockSpec((1, D_INNER), full),                          # D_fwd + D_rev
            pl.BlockSpec((1, D_INNER), full),                          # out_norm gamma
            pl.BlockSpec((1, D_INNER), full),                          # out_norm beta
            pl.BlockSpec((D_INNER, D), full),                          # out_proj^T
        ],
        out_specs=pl.BlockSpec((Bb * L, D), full),
        scratch_shapes=[pltpu.VMEM((L * D_STATE, BKD), jnp.float32)
                        for _ in range(3)],                            # dA / dBu / C staging
        compiler_params=pltpu.CompilerParams(
            dimension_semantics=("arbitrary",)),
    )(x2d, prep['ln1_g'], prep['ln1_b'], prep['w_in_t'], prep['w_proj_t'],
      prep['perm_t'], prep['w_bc_p'], prep['w_dt_t'], prep['dt_bias'],
      prep['a_rep'], prep['rev_mask'], prep['jflip'], prep['s_stack'],
      prep['dsum'], prep['outnorm_g'], prep['outnorm_b'], prep['w_out_t'])
    return out2d.reshape(Bb, Cc, Nn, Hh, Ww)


# ---------------- pure-JAX reference (faithful torch semantics) ----------------
def reference_forward(inp, p):
    B, C, N, H, W = inp.shape
    D = H * W
    L = C * N
    x_in = inp.reshape(B, L, D)

    def ln(x, g, b, eps):
        mu = jnp.mean(x, -1, keepdims=True)
        var = jnp.mean((x - mu) ** 2, -1, keepdims=True)
        return (x - mu) / jnp.sqrt(var + eps) * g + b

    x = ln(x_in, p['ln1_g'], p['ln1_b'], 1e-6)
    xz = x @ p['in_proj_w'].T
    xp, z = xz[..., :D_INNER], xz[..., D_INNER:]
    xp = xp @ p['proj_w'].T
    xp = xp * jax.nn.sigmoid(xp)
    xv = xp.reshape(B, D_INNER, L)
    xs = jnp.stack([xv, jnp.flip(xv, -1)], axis=1)
    x_dbl = jnp.einsum('bkdl,kcd->bkcl', xs, p['x_proj_w'])
    dts = jnp.einsum('bkrl,kdr->bkdl', x_dbl[:, :, :DT_RANK], p['dt_projs_w'])
    Bs = x_dbl[:, :, DT_RANK:DT_RANK + D_STATE]
    Cs = x_dbl[:, :, DT_RANK + D_STATE:]
    A = (-jnp.exp(p['A_logs'])).reshape(K_DIR, D_INNER, D_STATE)
    Dv = p['Ds'].reshape(K_DIR, D_INNER)
    db = p['dt_projs_b'].reshape(K_DIR, D_INNER)
    delta = _softplus(dts + db[None, :, :, None])

    def step(h, l):
        dl = delta[:, :, :, l]
        ul = xs[:, :, :, l]
        Bl = Bs[:, :, :, l]
        Cl = Cs[:, :, :, l]
        dA = jnp.exp(dl[..., None] * A[None])
        dBu = (dl * ul)[..., None] * Bl[:, :, None, :]
        h = dA * h + dBu
        y = jnp.sum(h * Cl[:, :, None, :], axis=-1) + Dv[None] * ul
        return h, y

    h0 = jnp.zeros((B, K_DIR, D_INNER, D_STATE), jnp.float32)
    _, ys = lax.scan(step, h0, jnp.arange(L))
    out_y = jnp.transpose(ys, (1, 2, 3, 0))                 # (B, K, Din, L)
    y = out_y[:, 0] + jnp.flip(out_y[:, 1], -1)
    y = jnp.transpose(y, (0, 2, 1))
    y = ln(y, p['outnorm_g'], p['outnorm_b'], 1e-5)
    y = y * (z * jax.nn.sigmoid(z))
    out = y @ p['out_proj_w'].T + x_in
    return out.reshape(B, C, N, H, W)


# ---------------- deterministic parameter init ----------------
def init_params(key):
    ks = jax.random.split(key, 12)
    dt_init_std = DT_RANK ** -0.5
    dt_min, dt_max, dt_floor = 0.001, 0.1, 1e-4
    dt = jnp.exp(jax.random.uniform(ks[0], (K_DIR, D_INNER))
                 * (jnp.log(dt_max) - jnp.log(dt_min)) + jnp.log(dt_min))
    dt = jnp.maximum(dt, dt_floor)
    inv_dt = dt + jnp.log(-jnp.expm1(-dt))                   # softplus inverse
    A_logs = jnp.tile(
        jnp.log(jnp.arange(1, D_STATE + 1, dtype=jnp.float32))[None, :],
        (K_DIR * D_INNER, 1))
    return {
        'ln1_g': 1.0 + 0.1 * jax.random.normal(ks[1], (D_MODEL,)),
        'ln1_b': 0.1 * jax.random.normal(ks[2], (D_MODEL,)),
        'in_proj_w': jax.random.normal(ks[3], (2 * D_INNER, D_MODEL)) / jnp.sqrt(1.0 * D_MODEL),
        'proj_w': jax.random.normal(ks[4], (D_INNER, D_INNER)) / jnp.sqrt(1.0 * D_INNER),
        'x_proj_w': jax.random.normal(ks[5], (K_DIR, DT_RANK + 2 * D_STATE, D_INNER)) / jnp.sqrt(1.0 * D_INNER),
        'dt_projs_w': jax.random.uniform(ks[6], (K_DIR, D_INNER, DT_RANK),
                                         minval=-dt_init_std, maxval=dt_init_std),
        'dt_projs_b': inv_dt,
        'A_logs': A_logs,
        'Ds': jnp.ones((K_DIR * D_INNER,), jnp.float32),
        'outnorm_g': 1.0 + 0.1 * jax.random.normal(ks[7], (D_INNER,)),
        'outnorm_b': 0.1 * jax.random.normal(ks[8], (D_INNER,)),
        'out_proj_w': jax.random.normal(ks[9], (D_MODEL, D_INNER)) / jnp.sqrt(1.0 * D_INNER),
    }


if __name__ == "__main__":
    key = jax.random.PRNGKey(0)
    kp, kx = jax.random.split(key)
    params = init_params(kp)
    prep = prepare_params(params)          # one-time, kernel-ready layouts
    x = jax.random.normal(kx, (B_SZ, C_SZ, N_SZ, H_SZ, W_SZ), dtype=jnp.float32)

    out = spec_mamba_block_forward(x, prep)
    out = jax.block_until_ready(out)

    assert out.shape == x.shape
    assert bool(jnp.all(jnp.isfinite(out)))

    ref = reference_forward(x, params)
    max_err = float(jnp.max(jnp.abs(out - ref)))
    # tightened from 1e-2 -> 2e-4 (all-f32 path; only summation-order / composed-weight noise)
    assert max_err < 2e-4, f"mismatch vs reference, max abs err = {max_err}"

    print("KERNEL_OK")
</pallas_src>

<mosaic_0001>
module attributes {stable_mosaic.version = 11 : i64} {
  func.func @_spec_mamba_kernel(%arg0: i32, %arg1: memref<16x32xf32, #tpu.memory_space<vmem>>, %arg2: memref<1x32xf32, #tpu.memory_space<vmem>>, %arg3: memref<1x32xf32, #tpu.memory_space<vmem>>, %arg4: memref<32x32xf32, #tpu.memory_space<vmem>>, %arg5: memref<16x16xf32, #tpu.memory_space<vmem>>, %arg6: memref<16x16xf32, #tpu.memory_space<vmem>>, %arg7: memref<64x16xf32, #tpu.memory_space<vmem>>, %arg8: memref<16x32xf32, #tpu.memory_space<vmem>>, %arg9: memref<1x32xf32, #tpu.memory_space<vmem>>, %arg10: memref<16x64xf32, #tpu.memory_space<vmem>>, %arg11: memref<1x64xf32, #tpu.memory_space<vmem>>, %arg12: memref<8x8xf32, #tpu.memory_space<vmem>>, %arg13: memref<256x64xf32, #tpu.memory_space<vmem>>, %arg14: memref<1x16xf32, #tpu.memory_space<vmem>>, %arg15: memref<1x16xf32, #tpu.memory_space<vmem>>, %arg16: memref<1x16xf32, #tpu.memory_space<vmem>>, %arg17: memref<16x32xf32, #tpu.memory_space<vmem>>, %arg18: memref<16x32xf32, #tpu.memory_space<vmem>>, %arg19: memref<128x64xf32, #tpu.memory_space<vmem>>, %arg20: memref<128x64xf32, #tpu.memory_space<vmem>>, %arg21: memref<128x64xf32, #tpu.memory_space<vmem>>) attributes {dimension_semantics = [#tpu.dimension_semantics<arbitrary>], iteration_bounds = array<i64: 1>, scalar_prefetch = 0 : i64, scratch_operands = 3 : i64, tpu.core_type = #tpu.core_type<tc>, window_params = [{pipeline_mode = #tpu.pipeline_mode<synchronous>, transform_indices = @transform_0, window_bounds = array<i64: 16, 32>}, {pipeline_mode = #tpu.pipeline_mode<synchronous>, transform_indices = @transform_1, window_bounds = array<i64: 1, 32>}, {pipeline_mode = #tpu.pipeline_mode<synchronous>, transform_indices = @transform_2, window_bounds = array<i64: 1, 32>}, {pipeline_mode = #tpu.pipeline_mode<synchronous>, transform_indices = @transform_3, window_bounds = array<i64: 32, 32>}, {pipeline_mode = #tpu.pipeline_mode<synchronous>, transform_indices = @transform_4, window_bounds = array<i64: 16, 16>}, {pipeline_mode = #tpu.pipeline_mode<synchronous>, transform_indices = @transform_5, window_bounds = array<i64: 16, 16>}, {pipeline_mode = #tpu.pipeline_mode<synchronous>, transform_indices = @transform_6, window_bounds = array<i64: 64, 16>}, {pipeline_mode = #tpu.pipeline_mode<synchronous>, transform_indices = @transform_7, window_bounds = array<i64: 16, 32>}, {pipeline_mode = #tpu.pipeline_mode<synchronous>, transform_indices = @transform_8, window_bounds = array<i64: 1, 32>}, {pipeline_mode = #tpu.pipeline_mode<synchronous>, transform_indices = @transform_9, window_bounds = array<i64: 16, 64>}, {pipeline_mode = #tpu.pipeline_mode<synchronous>, transform_indices = @transform_10, window_bounds = array<i64: 1, 64>}, {pipeline_mode = #tpu.pipeline_mode<synchronous>, transform_indices = @transform_11, window_bounds = array<i64: 8, 8>}, {pipeline_mode = #tpu.pipeline_mode<synchronous>, transform_indices = @transform_12, window_bounds = array<i64: 256, 64>}, {pipeline_mode = #tpu.pipeline_mode<synchronous>, transform_indices = @transform_13, window_bounds = array<i64: 1, 16>}, {pipeline_mode = #tpu.pipeline_mode<synchronous>, transform_indices = @transform_14, window_bounds = array<i64: 1, 16>}, {pipeline_mode = #tpu.pipeline_mode<synchronous>, transform_indices = @transform_15, window_bounds = array<i64: 1, 16>}, {pipeline_mode = #tpu.pipeline_mode<synchronous>, transform_indices = @transform_16, window_bounds = array<i64: 16, 32>}, {pipeline_mode = #tpu.pipeline_mode<synchronous>, transform_indices = @transform_17, window_bounds = array<i64: 16, 32>}]} {
    %c0 = arith.constant 0 : index
    %c0_0 = arith.constant 0 : index
    %0 = vector.load %arg1[%c0, %c0_0] : memref<16x32xf32, #tpu.memory_space<vmem>>, vector<16x32xf32>
    %cst = arith.constant dense<0.000000e+00> : vector<16xf32>
    %1 = vector.multi_reduction <add>, %0, %cst [1] : vector<16x32xf32> to vector<16xf32>
    %2 = vector.shape_cast %1 : vector<16xf32> to vector<16x1xf32>
    %cst_1 = arith.constant 3.200000e+01 : f32
    %3 = vector.broadcast %cst_1 : f32 to vector<16x1xf32>
    %4 = arith.divf %2, %3 : vector<16x1xf32>
    %5 = vector.broadcast %4 : vector<16x1xf32> to vector<16x32xf32>
    %6 = arith.subf %0, %5 : vector<16x32xf32>
    %7 = arith.mulf %6, %6 : vector<16x32xf32>
    %cst_2 = arith.constant dense<0.000000e+00> : vector<16xf32>
    %8 = vector.multi_reduction <add>, %7, %cst_2 [1] : vector<16x32xf32> to vector<16xf32>
    %9 = vector.shape_cast %8 : vector<16xf32> to vector<16x1xf32>
    %cst_3 = arith.constant 3.200000e+01 : f32
    %10 = vector.broadcast %cst_3 : f32 to vector<16x1xf32>
    %11 = arith.divf %9, %10 : vector<16x1xf32>
    %cst_4 = arith.constant 9.99999997E-7 : f32
    %12 = vector.broadcast %cst_4 : f32 to vector<16x1xf32>
    %13 = arith.addf %11, %12 : vector<16x1xf32>
    %14 = math.rsqrt %13 : vector<16x1xf32>
    %15 = vector.broadcast %14 : vector<16x1xf32> to vector<16x32xf32>
    %16 = arith.mulf %6, %15 : vector<16x32xf32>
    %c0_5 = arith.constant 0 : index
    %c0_6 = arith.constant 0 : index
    %17 = vector.load %arg2[%c0_5, %c0_6] : memref<1x32xf32, #tpu.memory_space<vmem>>, vector<1x32xf32>
    %18 = vector.broadcast %17 : vector<1x32xf32> to vector<16x32xf32>
    %19 = arith.mulf %16, %18 : vector<16x32xf32>
    %c0_7 = arith.constant 0 : index
    %c0_8 = arith.constant 0 : index
    %20 = vector.load %arg3[%c0_7, %c0_8] : memref<1x32xf32, #tpu.memory_space<vmem>>, vector<1x32xf32>
    %21 = vector.broadcast %20 : vector<1x32xf32> to vector<16x32xf32>
    %22 = arith.addf %19, %21 : vector<16x32xf32>
    %c0_9 = arith.constant 0 : index
    %c0_10 = arith.constant 0 : index
    %23 = vector.load %arg4[%c0_9, %c0_10] : memref<32x32xf32, #tpu.memory_space<vmem>>, vector<32x32xf32>
    %cst_11 = arith.constant dense<0.000000e+00> : vector<16x32xf32>
    %24 = tpu.matmul %22, %23, %cst_11 {dimension_numbers = #tpu.dot_dimension_numbers<[1], [0], [0], [1], [0, 0, 1, 1], [], []>} : vector<16x32xf32>, vector<32x32xf32>, vector<16x32xf32> -> vector<16x32xf32>
    %25 = vector.extract_strided_slice %24 {offsets = [0, 0], sizes = [16, 16], strides = [1, 1]} : vector<16x32xf32> to vector<16x16xf32>
    %26 = vector.extract_strided_slice %24 {offsets = [0, 16], sizes = [16, 16], strides = [1, 1]} : vector<16x32xf32> to vector<16x16xf32>
    %c0_12 = arith.constant 0 : index
    %c0_13 = arith.constant 0 : index
    %27 = vector.load %arg5[%c0_12, %c0_13] : memref<16x16xf32, #tpu.memory_space<vmem>>, vector<16x16xf32>
    %cst_14 = arith.constant dense<0.000000e+00> : vector<16x16xf32>
    %28 = tpu.matmul %25, %27, %cst_14 {dimension_numbers = #tpu.dot_dimension_numbers<[1], [0], [0], [1], [0, 0, 1, 1], [], []>} : vector<16x16xf32>, vector<16x16xf32>, vector<16x16xf32> -> vector<16x16xf32>
    %29 = arith.negf %28 : vector<16x16xf32>
    %30 = math.exp %29 : vector<16x16xf32>
    %cst_15 = arith.constant 1.000000e+00 : f32
    %31 = vector.broadcast %cst_15 : f32 to vector<16x16xf32>
    %32 = arith.addf %31, %30 : vector<16x16xf32>
    %33 = arith.divf %31, %32 : vector<16x16xf32>
    %34 = arith.mulf %28, %33 : vector<16x16xf32>
    %35 = vector.extract_strided_slice %34 {offsets = [0, 0], sizes = [8, 16], strides = [1, 1]} : vector<16x16xf32> to vector<8x16xf32>
    %36 = vector.extract_strided_slice %35 {offsets = [0, 0], sizes = [8, 8], strides = [1, 1]} : vector<8x16xf32> to vector<8x8xf32>
    %37 = vector.extract_strided_slice %35 {offsets = [0, 8], sizes = [8, 8], strides = [1, 1]} : vector<8x16xf32> to vector<8x8xf32>
    %38 = tpu.concatenate %36, %37 in 0 : vector<8x8xf32>, vector<8x8xf32> -> vector<16x8xf32>
    %39 = vector.extract_strided_slice %34 {offsets = [8, 0], sizes = [8, 16], strides = [1, 1]} : vector<16x16xf32> to vector<8x16xf32>
    %40 = vector.extract_strided_slice %39 {offsets = [0, 0], sizes = [8, 8], strides = [1, 1]} : vector<8x16xf32> to vector<8x8xf32>
    %41 = vector.extract_strided_slice %39 {offsets = [0, 8], sizes = [8, 8], strides = [1, 1]} : vector<8x16xf32> to vector<8x8xf32>
    %42 = tpu.concatenate %40, %41 in 0 : vector<8x8xf32>, vector<8x8xf32> -> vector<16x8xf32>
    %43 = tpu.concatenate %38, %42 in 1 : vector<16x8xf32>, vector<16x8xf32> -> vector<16x16xf32>
    %c0_16 = arith.constant 0 : index
    %c0_17 = arith.constant 0 : index
    %44 = vector.load %arg7[%c0_16, %c0_17] : memref<64x16xf32, #tpu.memory_space<vmem>>, vector<64x16xf32>
    %cst_18 = arith.constant dense<0.000000e+00> : vector<64x16xf32>
    %45 = tpu.matmul %44, %43, %cst_18 {dimension_numbers = #tpu.dot_dimension_numbers<[1], [0], [0], [1], [0, 0, 1, 1], [], []>} : vector<64x16xf32>, vector<16x16xf32>, vector<64x16xf32> -> vector<64x16xf32>
    %46 = tpu.transpose %43, [1, 0] : vector<16x16xf32> -> vector<16x16xf32>
    %c0_19 = arith.constant 0 : index
    %c0_20 = arith.constant 0 : index
    %47 = vector.load %arg6[%c0_19, %c0_20] : memref<16x16xf32, #tpu.memory_space<vmem>>, vector<16x16xf32>
    %cst_21 = arith.constant dense<0.000000e+00> : vector<16x16xf32>
    %48 = tpu.matmul %46, %47, %cst_21 {dimension_numbers = #tpu.dot_dimension_numbers<[1], [0], [0], [1], [0, 0, 1, 1], [], []>} : vector<16x16xf32>, vector<16x16xf32>, vector<16x16xf32> -> vector<16x16xf32>
    %c0_22 = arith.constant 0 : index
    %c0_23 = arith.constant 0 : index
    %49 = vector.load %arg8[%c0_22, %c0_23] : memref<16x32xf32, #tpu.memory_space<vmem>>, vector<16x32xf32>
    %cst_24 = arith.constant dense<0.000000e+00> : vector<16x32xf32>
    %50 = tpu.matmul %48, %49, %cst_24 {dimension_numbers = #tpu.dot_dimension_numbers<[1], [0], [0], [1], [0, 0, 1, 1], [], []>} : vector<16x16xf32>, vector<16x32xf32>, vector<16x32xf32> -> vector<16x32xf32>
    %c0_25 = arith.constant 0 : index
    %c0_26 = arith.constant 0 : index
    %51 = vector.load %arg9[%c0_25, %c0_26] : memref<1x32xf32, #tpu.memory_space<vmem>>, vector<1x32xf32>
    %52 = vector.broadcast %51 : vector<1x32xf32> to vector<16x32xf32>
    %53 = arith.addf %50, %52 : vector<16x32xf32>
    %cst_27 = arith.constant 2.000000e+01 : f32
    %54 = vector.broadcast %cst_27 : f32 to vector<16x32xf32>
    %55 = arith.cmpf ogt, %53, %54 : vector<16x32xf32>
    %56 = math.exp %53 : vector<16x32xf32>
    %57 = math.log1p %56 : vector<16x32xf32>
    %58 = arith.select %55, %53, %57 : vector<16x32xi1>, vector<16x32xf32>
    %59 = vector.extract_strided_slice %45 {offsets = [0, 0], sizes = [16, 16], strides = [1, 1]} : vector<64x16xf32> to vector<16x16xf32>
    %60 = vector.extract_strided_slice %45 {offsets = [16, 0], sizes = [16, 16], strides = [1, 1]} : vector<64x16xf32> to vector<16x16xf32>
    %61 = tpu.concatenate %59, %60 in 1 : vector<16x16xf32>, vector<16x16xf32> -> vector<16x32xf32>
    %62 = vector.extract_strided_slice %45 {offsets = [32, 0], sizes = [16, 16], strides = [1, 1]} : vector<64x16xf32> to vector<16x16xf32>
    %63 = vector.extract_strided_slice %45 {offsets = [48, 0], sizes = [16, 16], strides = [1, 1]} : vector<64x16xf32> to vector<16x16xf32>
    %64 = tpu.concatenate %62, %63 in 1 : vector<16x16xf32>, vector<16x16xf32> -> vector<16x32xf32>
    %65 = tpu.concatenate %61, %64 in 0 : vector<16x32xf32>, vector<16x32xf32> -> vector<32x32xf32>
    %66 = vector.extract_strided_slice %58 {offsets = [0, 0], sizes = [8, 32], strides = [1, 1]} : vector<16x32xf32> to vector<8x32xf32>
    %67 = vector.extract_strided_slice %58 {offsets = [8, 0], sizes = [8, 32], strides = [1, 1]} : vector<16x32xf32> to vector<8x32xf32>
    %68 = tpu.concatenate %66, %67 in 1 : vector<8x32xf32>, vector<8x32xf32> -> vector<8x64xf32>
    %69 = vector.extract_strided_slice %48 {offsets = [0, 0], sizes = [8, 16], strides = [1, 1]} : vector<16x16xf32> to vector<8x16xf32>
    %70 = vector.extract_strided_slice %48 {offsets = [0, 0], sizes = [8, 16], strides = [1, 1]} : vector<16x16xf32> to vector<8x16xf32>
    %71 = vector.extract_strided_slice %48 {offsets = [8, 0], sizes = [8, 16], strides = [1, 1]} : vector<16x16xf32> to vector<8x16xf32>
    %72 = vector.extract_strided_slice %48 {offsets = [8, 0], sizes = [8, 16], strides = [1, 1]} : vector<16x16xf32> to vector<8x16xf32>
    %73 = tpu.concatenate %69, %70, %71, %72 in 1 : vector<8x16xf32>, vector<8x16xf32>, vector<8x16xf32>, vector<8x16xf32> -> vector<8x64xf32>
    %74 = arith.mulf %68, %73 : vector<8x64xf32>
    %c0_28 = arith.constant 0 : index
    %c0_29 = arith.constant 0 : index
    %75 = vector.load %arg12[%c0_28, %c0_29] : memref<8x8xf32, #tpu.memory_space<vmem>>, vector<8x8xf32>
    %c0_30 = arith.constant 0 : index
    %c0_31 = arith.constant 0 : index
    %76 = vector.load %arg11[%c0_30, %c0_31] : memref<1x64xf32, #tpu.memory_space<vmem>>, vector<1x64xf32>
    %cst_32 = arith.constant dense<0.000000e+00> : vector<8x64xf32>
    %77 = tpu.matmul %75, %68, %cst_32 {dimension_numbers = #tpu.dot_dimension_numbers<[1], [0], [0], [1], [0, 0, 1, 1], [], []>} : vector<8x8xf32>, vector<8x64xf32>, vector<8x64xf32> -> vector<8x64xf32>
    %cst_33 = arith.constant dense<0.000000e+00> : vector<8x64xf32>
    %78 = tpu.matmul %75, %74, %cst_33 {dimension_numbers = #tpu.dot_dimension_numbers<[1], [0], [0], [1], [0, 0, 1, 1], [], []>} : vector<8x8xf32>, vector<8x64xf32>, vector<8x64xf32> -> vector<8x64xf32>
    %79 = arith.subf %77, %68 : vector<8x64xf32>
    %80 = vector.broadcast %76 : vector<1x64xf32> to vector<8x64xf32>
    %81 = arith.mulf %80, %79 : vector<8x64xf32>
    %82 = arith.addf %68, %81 : vector<8x64xf32>
    %83 = arith.subf %78, %74 : vector<8x64xf32>
    %84 = vector.broadcast %76 : vector<1x64xf32> to vector<8x64xf32>
    %85 = arith.mulf %84, %83 : vector<8x64xf32>
    %86 = arith.addf %74, %85 : vector<8x64xf32>
    %c0_34 = arith.constant 0 : index
    %c0_35 = arith.constant 0 : index
    %87 = vector.load %arg10[%c0_34, %c0_35] : memref<16x64xf32, #tpu.memory_space<vmem>>, vector<16x64xf32>
    %c0_36 = arith.constant 0 : index
    %c0_37 = arith.constant 0 : index
    %88 = vector.load %arg13[%c0_36, %c0_37] : memref<256x64xf32, #tpu.memory_space<vmem>>, vector<32x64xf32>
    %cst_38 = arith.constant dense<0.000000e+00> : vector<32x64xf32>
    %89 = tpu.matmul %65, %88, %cst_38 {dimension_numbers = #tpu.dot_dimension_numbers<[1], [0], [0], [1], [0, 0, 1, 1], [], []>} : vector<32x32xf32>, vector<32x64xf32>, vector<32x64xf32> -> vector<32x64xf32>
    %90 = vector.extract_strided_slice %82 {offsets = [0, 0], sizes = [1, 64], strides = [1, 1]} : vector<8x64xf32> to vector<1x64xf32>
    %91 = vector.broadcast %90 : vector<1x64xf32> to vector<16x64xf32>
    %92 = arith.mulf %91, %87 : vector<16x64xf32>
    %93 = math.exp %92 : vector<16x64xf32>
    %c0_39 = arith.constant 0 : index
    %c0_40 = arith.constant 0 : index
    %94 = vector.load %arg19[%c0_39, %c0_40] : memref<128x64xf32, #tpu.memory_space<vmem>>, vector<16x64xf32>
    tpu.vector_store %arg19[%c0_39, %c0_40], %93 {strides = array<i32>} : memref<128x64xf32, #tpu.memory_space<vmem>>, vector<16x64xf32>,
    %95 = vector.extract_strided_slice %89 {offsets = [0, 0], sizes = [16, 64], strides = [1, 1]} : vector<32x64xf32> to vector<16x64xf32>
    %96 = vector.extract_strided_slice %86 {offsets = [0, 0], sizes = [1, 64], strides = [1, 1]} : vector<8x64xf32> to vector<1x64xf32>
    %97 = vector.broadcast %96 : vector<1x64xf32> to vector<16x64xf32>
    %98 = arith.mulf %95, %97 : vector<16x64xf32>
    %c0_41 = arith.constant 0 : index
    %c0_42 = arith.constant 0 : index
    %99 = vector.load %arg20[%c0_41, %c0_42] : memref<128x64xf32, #tpu.memory_space<vmem>>, vector<16x64xf32>
    tpu.vector_store %arg20[%c0_41, %c0_42], %98 {strides = array<i32>} : memref<128x64xf32, #tpu.memory_space<vmem>>, vector<16x64xf32>,
    %100 = vector.extract_strided_slice %89 {offsets = [16, 0], sizes = [16, 64], strides = [1, 1]} : vector<32x64xf32> to vector<16x64xf32>
    %c0_43 = arith.constant 0 : index
    %c0_44 = arith.constant 0 : index
    %101 = vector.load %arg21[%c0_43, %c0_44] : memref<128x64xf32, #tpu.memory_space<vmem>>, vector<16x64xf32>
    tpu.vector_store %arg21[%c0_43, %c0_44], %100 {strides = array<i32>} : memref<128x64xf32, #tpu.memory_space<vmem>>, vector<16x64xf32>,
    %c32 = arith.constant 32 : index
    %c0_45 = arith.constant 0 : index
    %102 = vector.load %arg13[%c32, %c0_45] : memref<256x64xf32, #tpu.memory_space<vmem>>, vector<32x64xf32>
    %cst_46 = arith.constant dense<0.000000e+00> : vector<32x64xf32>
    %103 = tpu.matmul %65, %102, %cst_46 {dimension_numbers = #tpu.dot_dimension_numbers<[1], [0], [0], [1], [0, 0, 1, 1], [], []>} : vector<32x32xf32>, vector<32x64xf32>, vector<32x64xf32> -> vector<32x64xf32>
    %104 = vector.extract_strided_slice %82 {offsets = [1, 0], sizes = [1, 64], strides = [1, 1]} : vector<8x64xf32> to vector<1x64xf32>
    %105 = vector.broadcast %104 : vector<1x64xf32> to vector<16x64xf32>
    %106 = arith.mulf %105, %87 : vector<16x64xf32>
    %107 = math.exp %106 : vector<16x64xf32>
    %c16 = arith.constant 16 : index
    %c0_47 = arith.constant 0 : index
    %108 = vector.load %arg19[%c16, %c0_47] : memref<128x64xf32, #tpu.memory_space<vmem>>, vector<16x64xf32>
    tpu.vector_store %arg19[%c16, %c0_47], %107 {strides = array<i32>} : memref<128x64xf32, #tpu.memory_space<vmem>>, vector<16x64xf32>,
    %109 = vector.extract_strided_slice %103 {offsets = [0, 0], sizes = [16, 64], strides = [1, 1]} : vector<32x64xf32> to vector<16x64xf32>
    %110 = vector.extract_strided_slice %86 {offsets = [1, 0], sizes = [1, 64], strides = [1, 1]} : vector<8x64xf32> to vector<1x64xf32>
    %111 = vector.broadcast %110 : vector<1x64xf32> to vector<16x64xf32>
    %112 = arith.mulf %109, %111 : vector<16x64xf32>
    %c16_48 = arith.constant 16 : index
    %c0_49 = arith.constant 0 : index
    %113 = vector.load %arg20[%c16_48, %c0_49] : memref<128x64xf32, #tpu.memory_space<vmem>>, vector<16x64xf32>
    tpu.vector_store %arg20[%c16_48, %c0_49], %112 {strides = array<i32>} : memref<128x64xf32, #tpu.memory_space<vmem>>, vector<16x64xf32>,
    %114 = vector.extract_strided_slice %103 {offsets = [16, 0], sizes = [16, 64], strides = [1, 1]} : vector<32x64xf32> to vector<16x64xf32>
    %c16_50 = arith.constant 16 : index
    %c0_51 = arith.constant 0 : index
    %115 = vector.load %arg21[%c16_50, %c0_51] : memref<128x64xf32, #tpu.memory_space<vmem>>, vector<16x64xf32>
    tpu.vector_store %arg21[%c16_50, %c0_51], %114 {strides = array<i32>} : memref<128x64xf32, #tpu.memory_space<vmem>>, vector<16x64xf32>,
    %c64 = arith.constant 64 : index
    %c0_52 = arith.constant 0 : index
    %116 = vector.load %arg13[%c64, %c0_52] : memref<256x64xf32, #tpu.memory_space<vmem>>, vector<32x64xf32>
    %cst_53 = arith.constant dense<0.000000e+00> : vector<32x64xf32>
    %117 = tpu.matmul %65, %116, %cst_53 {dimension_numbers = #tpu.dot_dimension_numbers<[1], [0], [0], [1], [0, 0, 1, 1], [], []>} : vector<32x32xf32>, vector<32x64xf32>, vector<32x64xf32> -> vector<32x64xf32>
    %118 = vector.extract_strided_slice %82 {offsets = [2, 0], sizes = [1, 64], strides = [1, 1]} : vector<8x64xf32> to vector<1x64xf32>
    %119 = vector.broadcast %118 : vector<1x64xf32> to vector<16x64xf32>
    %120 = arith.mulf %119, %87 : vector<16x64xf32>
    %121 = math.exp %120 : vector<16x64xf32>
    %c32_54 = arith.constant 32 : index
    %c0_55 = arith.constant 0 : index
    %122 = vector.load %arg19[%c32_54, %c0_55] : memref<128x64xf32, #tpu.memory_space<vmem>>, vector<16x64xf32>
    tpu.vector_store %arg19[%c32_54, %c0_55], %121 {strides = array<i32>} : memref<128x64xf32, #tpu.memory_space<vmem>>, vector<16x64xf32>,
    %123 = vector.extract_strided_slice %117 {offsets = [0, 0], sizes = [16, 64], strides = [1, 1]} : vector<32x64xf32> to vector<16x64xf32>
    %124 = vector.extract_strided_slice %86 {offsets = [2, 0], sizes = [1, 64], strides = [1, 1]} : vector<8x64xf32> to vector<1x64xf32>
    %125 = vector.broadcast %124 : vector<1x64xf32> to vector<16x64xf32>
    %126 = arith.mulf %123, %125 : vector<16x64xf32>
    %c32_56 = arith.constant 32 : index
    %c0_57 = arith.constant 0 : index
    %127 = vector.load %arg20[%c32_56, %c0_57] : memref<128x64xf32, #tpu.memory_space<vmem>>, vector<16x64xf32>
    tpu.vector_store %arg20[%c32_56, %c0_57], %126 {strides = array<i32>} : memref<128x64xf32, #tpu.memory_space<vmem>>, vector<16x64xf32>,
    %128 = vector.extract_strided_slice %117 {offsets = [16, 0], sizes = [16, 64], strides = [1, 1]} : vector<32x64xf32> to vector<16x64xf32>
    %c32_58 = arith.constant 32 : index
    %c0_59 = arith.constant 0 : index
    %129 = vector.load %arg21[%c32_58, %c0_59] : memref<128x64xf32, #tpu.memory_space<vmem>>, vector<16x64xf32>
    tpu.vector_store %arg21[%c32_58, %c0_59], %128 {strides = array<i32>} : memref<128x64xf32, #tpu.memory_space<vmem>>, vector<16x64xf32>,
    %c96 = arith.constant 96 : index
    %c0_60 = arith.constant 0 : index
    %130 = vector.load %arg13[%c96, %c0_60] : memref<256x64xf32, #tpu.memory_space<vmem>>, vector<32x64xf32>
    %cst_61 = arith.constant dense<0.000000e+00> : vector<32x64xf32>
    %131 = tpu.matmul %65, %130, %cst_61 {dimension_numbers = #tpu.dot_dimension_numbers<[1], [0], [0], [1], [0, 0, 1, 1], [], []>} : vector<32x32xf32>, vector<32x64xf32>, vector<32x64xf32> -> vector<32x64xf32>
    %132 = vector.extract_strided_slice %82 {offsets = [3, 0], sizes = [1, 64], strides = [1, 1]} : vector<8x64xf32> to vector<1x64xf32>
    %133 = vector.broadcast %132 : vector<1x64xf32> to vector<16x64xf32>
    %134 = arith.mulf %133, %87 : vector<16x64xf32>
    %135 = math.exp %134 : vector<16x64xf32>
    %c48 = arith.constant 48 : index
    %c0_62 = arith.constant 0 : index
    %136 = vector.load %arg19[%c48, %c0_62] : memref<128x64xf32, #tpu.memory_space<vmem>>, vector<16x64xf32>
    tpu.vector_store %arg19[%c48, %c0_62], %135 {strides = array<i32>} : memref<128x64xf32, #tpu.memory_space<vmem>>, vector<16x64xf32>,
    %137 = vector.extract_strided_slice %131 {offsets = [0, 0], sizes = [16, 64], strides = [1, 1]} : vector<32x64xf32> to vector<16x64xf32>
    %138 = vector.extract_strided_slice %86 {offsets = [3, 0], sizes = [1, 64], strides = [1, 1]} : vector<8x64xf32> to vector<1x64xf32>
    %139 = vector.broadcast %138 : vector<1x64xf32> to vector<16x64xf32>
    %140 = arith.mulf %137, %139 : vector<16x64xf32>
    %c48_63 = arith.constant 48 : index
    %c0_64 = arith.constant 0 : index
    %141 = vector.load %arg20[%c48_63, %c0_64] : memref<128x64xf32, #tpu.memory_space<vmem>>, vector<16x64xf32>
    tpu.vector_store %arg20[%c48_63, %c0_64], %140 {strides = array<i32>} : memref<128x64xf32, #tpu.memory_space<vmem>>, vector<16x64xf32>,
    %142 = vector.extract_strided_slice %131 {offsets = [16, 0], sizes = [16, 64], strides = [1, 1]} : vector<32x64xf32> to vector<16x64xf32>
    %c48_65 = arith.constant 48 : index
    %c0_66 = arith.constant 0 : index
    %143 = vector.load %arg21[%c48_65, %c0_66] : memref<128x64xf32, #tpu.memory_space<vmem>>, vector<16x64xf32>
    tpu.vector_store %arg21[%c48_65, %c0_66], %142 {strides = array<i32>} : memref<128x64xf32, #tpu.memory_space<vmem>>, vector<16x64xf32>,
    %c128 = arith.constant 128 : index
    %c0_67 = arith.constant 0 : index
    %144 = vector.load %arg13[%c128, %c0_67] : memref<256x64xf32, #tpu.memory_space<vmem>>, vector<32x64xf32>
    %cst_68 = arith.constant dense<0.000000e+00> : vector<32x64xf32>
    %145 = tpu.matmul %65, %144, %cst_68 {dimension_numbers = #tpu.dot_dimension_numbers<[1], [0], [0], [1], [0, 0, 1, 1], [], []>} : vector<32x32xf32>, vector<32x64xf32>, vector<32x64xf32> -> vector<32x64xf32>
    %146 = vector.extract_strided_slice %82 {offsets = [4, 0], sizes = [1, 64], strides = [1, 1]} : vector<8x64xf32> to vector<1x64xf32>
    %147 = vector.broadcast %146 : vector<1x64xf32> to vector<16x64xf32>
    %148 = arith.mulf %147, %87 : vector<16x64xf32>
    %149 = math.exp %148 : vector<16x64xf32>
    %c64_69 = arith.constant 64 : index
    %c0_70 = arith.constant 0 : index
    %150 = vector.load %arg19[%c64_69, %c0_70] : memref<128x64xf32, #tpu.memory_space<vmem>>, vector<16x64xf32>
    tpu.vector_store %arg19[%c64_69, %c0_70], %149 {strides = array<i32>} : memref<128x64xf32, #tpu.memory_space<vmem>>, vector<16x64xf32>,
    %151 = vector.extract_strided_slice %145 {offsets = [0, 0], sizes = [16, 64], strides = [1, 1]} : vector<32x64xf32> to vector<16x64xf32>
    %152 = vector.extract_strided_slice %86 {offsets = [4, 0], sizes = [1, 64], strides = [1, 1]} : vector<8x64xf32> to vector<1x64xf32>
    %153 = vector.broadcast %152 : vector<1x64xf32> to vector<16x64xf32>
    %154 = arith.mulf %151, %153 : vector<16x64xf32>
    %c64_71 = arith.constant 64 : index
    %c0_72 = arith.constant 0 : index
    %155 = vector.load %arg20[%c64_71, %c0_72] : memref<128x64xf32, #tpu.memory_space<vmem>>, vector<16x64xf32>
    tpu.vector_store %arg20[%c64_71, %c0_72], %154 {strides = array<i32>} : memref<128x64xf32, #tpu.memory_space<vmem>>, vector<16x64xf32>,
    %156 = vector.extract_strided_slice %145 {offsets = [16, 0], sizes = [16, 64], strides = [1, 1]} : vector<32x64xf32> to vector<16x64xf32>
    %c64_73 = arith.constant 64 : index
    %c0_74 = arith.constant 0 : index
    %157 = vector.load %arg21[%c64_73, %c0_74] : memref<128x64xf32, #tpu.memory_space<vmem>>, vector<16x64xf32>
    tpu.vector_store %arg21[%c64_73, %c0_74], %156 {strides = array<i32>} : memref<128x64xf32, #tpu.memory_space<vmem>>, vector<16x64xf32>,
    %c160 = arith.constant 160 : index
    %c0_75 = arith.constant 0 : index
    %158 = vector.load %arg13[%c160, %c0_75] : memref<256x64xf32, #tpu.memory_space<vmem>>, vector<32x64xf32>
    %cst_76 = arith.constant dense<0.000000e+00> : vector<32x64xf32>
    %159 = tpu.matmul %65, %158, %cst_76 {dimension_numbers = #tpu.dot_dimension_numbers<[1], [0], [0], [1], [0, 0, 1, 1], [], []>} : vector<32x32xf32>, vector<32x64xf32>, vector<32x64xf32> -> vector<32x64xf32>
    %160 = vector.extract_strided_slice %82 {offsets = [5, 0], sizes = [1, 64], strides = [1, 1]} : vector<8x64xf32> to vector<1x64xf32>
    %161 = vector.broadcast %160 : vector<1x64xf32> to vector<16x64xf32>
    %162 = arith.mulf %161, %87 : vector<16x64xf32>
    %163 = math.exp %162 : vector<16x64xf32>
    %c80 = arith.constant 80 : index
    %c0_77 = arith.constant 0 : index
    %164 = vector.load %arg19[%c80, %c0_77] : memref<128x64xf32, #tpu.memory_space<vmem>>, vector<16x64xf32>
    tpu.vector_store %arg19[%c80, %c0_77], %163 {strides = array<i32>} : memref<128x64xf32, #tpu.memory_space<vmem>>, vector<16x64xf32>,
    %165 = vector.extract_strided_slice %159 {offsets = [0, 0], sizes = [16, 64], strides = [1, 1]} : vector<32x64xf32> to vector<16x64xf32>
    %166 = vector.extract_strided_slice %86 {offsets = [5, 0], sizes = [1, 64], strides = [1, 1]} : vector<8x64xf32> to vector<1x64xf32>
    %167 = vector.broadcast %166 : vector<1x64xf32> to vector<16x64xf32>
    %168 = arith.mulf %165, %167 : vector<16x64xf32>
    %c80_78 = arith.constant 80 : index
    %c0_79 = arith.constant 0 : index
    %169 = vector.load %arg20[%c80_78, %c0_79] : memref<128x64xf32, #tpu.memory_space<vmem>>, vector<16x64xf32>
    tpu.vector_store %arg20[%c80_78, %c0_79], %168 {strides = array<i32>} : memref<128x64xf32, #tpu.memory_space<vmem>>, vector<16x64xf32>,
    %170 = vector.extract_strided_slice %159 {offsets = [16, 0], sizes = [16, 64], strides = [1, 1]} : vector<32x64xf32> to vector<16x64xf32>
    %c80_80 = arith.constant 80 : index
    %c0_81 = arith.constant 0 : index
    %171 = vector.load %arg21[%c80_80, %c0_81] : memref<128x64xf32, #tpu.memory_space<vmem>>, vector<16x64xf32>
    tpu.vector_store %arg21[%c80_80, %c0_81], %170 {strides = array<i32>} : memref<128x64xf32, #tpu.memory_space<vmem>>, vector<16x64xf32>,
    %c192 = arith.constant 192 : index
    %c0_82 = arith.constant 0 : index
    %172 = vector.load %arg13[%c192, %c0_82] : memref<256x64xf32, #tpu.memory_space<vmem>>, vector<32x64xf32>
    %cst_83 = arith.constant dense<0.000000e+00> : vector<32x64xf32>
    %173 = tpu.matmul %65, %172, %cst_83 {dimension_numbers = #tpu.dot_dimension_numbers<[1], [0], [0], [1], [0, 0, 1, 1], [], []>} : vector<32x32xf32>, vector<32x64xf32>, vector<32x64xf32> -> vector<32x64xf32>
    %174 = vector.extract_strided_slice %82 {offsets = [6, 0], sizes = [1, 64], strides = [1, 1]} : vector<8x64xf32> to vector<1x64xf32>
    %175 = vector.broadcast %174 : vector<1x64xf32> to vector<16x64xf32>
    %176 = arith.mulf %175, %87 : vector<16x64xf32>
    %177 = math.exp %176 : vector<16x64xf32>
    %c96_84 = arith.constant 96 : index
    %c0_85 = arith.constant 0 : index
    %178 = vector.load %arg19[%c96_84, %c0_85] : memref<128x64xf32, #tpu.memory_space<vmem>>, vector<16x64xf32>
    tpu.vector_store %arg19[%c96_84, %c0_85], %177 {strides = array<i32>} : memref<128x64xf32, #tpu.memory_space<vmem>>, vector<16x64xf32>,
    %179 = vector.extract_strided_slice %173 {offsets = [0, 0], sizes = [16, 64], strides = [1, 1]} : vector<32x64xf32> to vector<16x64xf32>
    %180 = vector.extract_strided_slice %86 {offsets = [6, 0], sizes = [1, 64], strides = [1, 1]} : vector<8x64xf32> to vector<1x64xf32>
    %181 = vector.broadcast %180 : vector<1x64xf32> to vector<16x64xf32>
    %182 = arith.mulf %179, %181 : vector<16x64xf32>
    %c96_86 = arith.constant 96 : index
    %c0_87 = arith.constant 0 : index
    %183 = vector.load %arg20[%c96_86, %c0_87] : memref<128x64xf32, #tpu.memory_space<vmem>>, vector<16x64xf32>
    tpu.vector_store %arg20[%c96_86, %c0_87], %182 {strides = array<i32>} : memref<128x64xf32, #tpu.memory_space<vmem>>, vector<16x64xf32>,
    %184 = vector.extract_strided_slice %173 {offsets = [16, 0], sizes = [16, 64], strides = [1, 1]} : vector<32x64xf32> to vector<16x64xf32>
    %c96_88 = arith.constant 96 : index
    %c0_89 = arith.constant 0 : index
    %185 = vector.load %arg21[%c96_88, %c0_89] : memref<128x64xf32, #tpu.memory_space<vmem>>, vector<16x64xf32>
    tpu.vector_store %arg21[%c96_88, %c0_89], %184 {strides = array<i32>} : memref<128x64xf32, #tpu.memory_space<vmem>>, vector<16x64xf32>,
    %c224 = arith.constant 224 : index
    %c0_90 = arith.constant 0 : index
    %186 = vector.load %arg13[%c224, %c0_90] : memref<256x64xf32, #tpu.memory_space<vmem>>, vector<32x64xf32>
    %cst_91 = arith.constant dense<0.000000e+00> : vector<32x64xf32>
    %187 = tpu.matmul %65, %186, %cst_91 {dimension_numbers = #tpu.dot_dimension_numbers<[1], [0], [0], [1], [0, 0, 1, 1], [], []>} : vector<32x32xf32>, vector<32x64xf32>, vector<32x64xf32> -> vector<32x64xf32>
    %188 = vector.extract_strided_slice %82 {offsets = [7, 0], sizes = [1, 64], strides = [1, 1]} : vector<8x64xf32> to vector<1x64xf32>
    %189 = vector.broadcast %188 : vector<1x64xf32> to vector<16x64xf32>
    %190 = arith.mulf %189, %87 : vector<16x64xf32>
    %191 = math.exp %190 : vector<16x64xf32>
    %c112 = arith.constant 112 : index
    %c0_92 = arith.constant 0 : index
    %192 = vector.load %arg19[%c112, %c0_92] : memref<128x64xf32, #tpu.memory_space<vmem>>, vector<16x64xf32>
    tpu.vector_store %arg19[%c112, %c0_92], %191 {strides = array<i32>} : memref<128x64xf32, #tpu.memory_space<vmem>>, vector<16x64xf32>,
    %193 = vector.extract_strided_slice %187 {offsets = [0, 0], sizes = [16, 64], strides = [1, 1]} : vector<32x64xf32> to vector<16x64xf32>
    %194 = vector.extract_strided_slice %86 {offsets = [7, 0], sizes = [1, 64], strides = [1, 1]} : vector<8x64xf32> to vector<1x64xf32>
    %195 = vector.broadcast %194 : vector<1x64xf32> to vector<16x64xf32>
    %196 = arith.mulf %193, %195 : vector<16x64xf32>
    %c112_93 = arith.constant 112 : index
    %c0_94 = arith.constant 0 : index
    %197 = vector.load %arg20[%c112_93, %c0_94] : memref<128x64xf32, #tpu.memory_space<vmem>>, vector<16x64xf32>
    tpu.vector_store %arg20[%c112_93, %c0_94], %196 {strides = array<i32>} : memref<128x64xf32, #tpu.memory_space<vmem>>, vector<16x64xf32>,
    %198 = vector.extract_strided_slice %187 {offsets = [16, 0], sizes = [16, 64], strides = [1, 1]} : vector<32x64xf32> to vector<16x64xf32>
    %c112_95 = arith.constant 112 : index
    %c0_96 = arith.constant 0 : index
    %199 = vector.load %arg21[%c112_95, %c0_96] : memref<128x64xf32, #tpu.memory_space<vmem>>, vector<16x64xf32>
    tpu.vector_store %arg21[%c112_95, %c0_96], %198 {strides = array<i32>} : memref<128x64xf32, #tpu.memory_space<vmem>>, vector<16x64xf32>,
    %cst_97 = arith.constant 0.000000e+00 : f32
    %200 = vector.broadcast %cst_97 : f32 to vector<16x64xf32>
    %c0_98 = arith.constant 0 : index
    %c0_99 = arith.constant 0 : index
    %201 = vector.load %arg19[%c0_98, %c0_99] : memref<128x64xf32, #tpu.memory_space<vmem>>, vector<16x64xf32>
    %202 = arith.mulf %201, %200 : vector<16x64xf32>
    %c0_100 = arith.constant 0 : index
    %c0_101 = arith.constant 0 : index
    %203 = vector.load %arg20[%c0_100, %c0_101] : memref<128x64xf32, #tpu.memory_space<vmem>>, vector<16x64xf32>
    %204 = arith.addf %202, %203 : vector<16x64xf32>
    %c0_102 = arith.constant 0 : index
    %c0_103 = arith.constant 0 : index
    %205 = vector.load %arg21[%c0_102, %c0_103] : memref<128x64xf32, #tpu.memory_space<vmem>>, vector<16x64xf32>
    %206 = arith.mulf %204, %205 : vector<16x64xf32>
    %cst_104 = arith.constant dense<0.000000e+00> : vector<64xf32>
    %207 = vector.multi_reduction <add>, %206, %cst_104 [0] : vector<16x64xf32> to vector<64xf32>
    %208 = vector.shape_cast %207 : vector<64xf32> to vector<1x64xf32>
    %c16_105 = arith.constant 16 : index
    %c0_106 = arith.constant 0 : index
    %209 = vector.load %arg19[%c16_105, %c0_106] : memref<128x64xf32, #tpu.memory_space<vmem>>, vector<16x64xf32>
    %210 = arith.mulf %209, %204 : vector<16x64xf32>
    %c16_107 = arith.constant 16 : index
    %c0_108 = arith.constant 0 : index
    %211 = vector.load %arg20[%c16_107, %c0_108] : memref<128x64xf32, #tpu.memory_space<vmem>>, vector<16x64xf32>
    %212 = arith.addf %210, %211 : vector<16x64xf32>
    %c16_109 = arith.constant 16 : index
    %c0_110 = arith.constant 0 : index
    %213 = vector.load %arg21[%c16_109, %c0_110] : memref<128x64xf32, #tpu.memory_space<vmem>>, vector<16x64xf32>
    %214 = arith.mulf %212, %213 : vector<16x64xf32>
    %cst_111 = arith.constant dense<0.000000e+00> : vector<64xf32>
    %215 = vector.multi_reduction <add>, %214, %cst_111 [0] : vector<16x64xf32> to vector<64xf32>
    %216 = vector.shape_cast %215 : vector<64xf32> to vector<1x64xf32>
    %c32_112 = arith.constant 32 : index
    %c0_113 = arith.constant 0 : index
    %217 = vector.load %arg19[%c32_112, %c0_113] : memref<128x64xf32, #tpu.memory_space<vmem>>, vector<16x64xf32>
    %218 = arith.mulf %217, %212 : vector<16x64xf32>
    %c32_114 = arith.constant 32 : index
    %c0_115 = arith.constant 0 : index
    %219 = vector.load %arg20[%c32_114, %c0_115] : memref<128x64xf32, #tpu.memory_space<vmem>>, vector<16x64xf32>
    %220 = arith.addf %218, %219 : vector<16x64xf32>
    %c32_116 = arith.constant 32 : index
    %c0_117 = arith.constant 0 : index
    %221 = vector.load %arg21[%c32_116, %c0_117] : memref<128x64xf32, #tpu.memory_space<vmem>>, vector<16x64xf32>
    %222 = arith.mulf %220, %221 : vector<16x64xf32>
    %cst_118 = arith.constant dense<0.000000e+00> : vector<64xf32>
    %223 = vector.multi_reduction <add>, %222, %cst_118 [0] : vector<16x64xf32> to vector<64xf32>
    %224 = vector.shape_cast %223 : vector<64xf32> to vector<1x64xf32>
    %c48_119 = arith.constant 48 : index
    %c0_120 = arith.constant 0 : index
    %225 = vector.load %arg19[%c48_119, %c0_120] : memref<128x64xf32, #tpu.memory_space<vmem>>, vector<16x64xf32>
    %226 = arith.mulf %225, %220 : vector<16x64xf32>
    %c48_121 = arith.constant 48 : index
    %c0_122 = arith.constant 0 : index
    %227 = vector.load %arg20[%c48_121, %c0_122] : memref<128x64xf32, #tpu.memory_space<vmem>>, vector<16x64xf32>
    %228 = arith.addf %226, %227 : vector<16x64xf32>
    %c48_123 = arith.constant 48 : index
    %c0_124 = arith.constant 0 : index
    %229 = vector.load %arg21[%c48_123, %c0_124] : memref<128x64xf32, #tpu.memory_space<vmem>>, vector<16x64xf32>
    %230 = arith.mulf %228, %229 : vector<16x64xf32>
    %cst_125 = arith.constant dense<0.000000e+00> : vector<64xf32>
    %231 = vector.multi_reduction <add>, %230, %cst_125 [0] : vector<16x64xf32> to vector<64xf32>
    %232 = vector.shape_cast %231 : vector<64xf32> to vector<1x64xf32>
    %c64_126 = arith.constant 64 : index
    %c0_127 = arith.constant 0 : index
    %233 = vector.load %arg19[%c64_126, %c0_127] : memref<128x64xf32, #tpu.memory_space<vmem>>, vector<16x64xf32>
    %234 = arith.mulf %233, %228 : vector<16x64xf32>
    %c64_128 = arith.constant 64 : index
    %c0_129 = arith.constant 0 : index
    %235 = vector.load %arg20[%c64_128, %c0_129] : memref<128x64xf32, #tpu.memory_space<vmem>>, vector<16x64xf32>
    %236 = arith.addf %234, %235 : vector<16x64xf32>
    %c64_130 = arith.constant 64 : index
    %c0_131 = arith.constant 0 : index
    %237 = vector.load %arg21[%c64_130, %c0_131] : memref<128x64xf32, #tpu.memory_space<vmem>>, vector<16x64xf32>
    %238 = arith.mulf %236, %237 : vector<16x64xf32>
    %cst_132 = arith.constant dense<0.000000e+00> : vector<64xf32>
    %239 = vector.multi_reduction <add>, %238, %cst_132 [0] : vector<16x64xf32> to vector<64xf32>
    %240 = vector.shape_cast %239 : vector<64xf32> to vector<1x64xf32>
    %c80_133 = arith.constant 80 : index
    %c0_134 = arith.constant 0 : index
    %241 = vector.load %arg19[%c80_133, %c0_134] : memref<128x64xf32, #tpu.memory_space<vmem>>, vector<16x64xf32>
    %242 = arith.mulf %241, %236 : vector<16x64xf32>
    %c80_135 = arith.constant 80 : index
    %c0_136 = arith.constant 0 : index
    %243 = vector.load %arg20[%c80_135, %c0_136] : memref<128x64xf32, #tpu.memory_space<vmem>>, vector<16x64xf32>
    %244 = arith.addf %242, %243 : vector<16x64xf32>
    %c80_137 = arith.constant 80 : index
    %c0_138 = arith.constant 0 : index
    %245 = vector.load %arg21[%c80_137, %c0_138] : memref<128x64xf32, #tpu.memory_space<vmem>>, vector<16x64xf32>
    %246 = arith.mulf %244, %245 : vector<16x64xf32>
    %cst_139 = arith.constant dense<0.000000e+00> : vector<64xf32>
    %247 = vector.multi_reduction <add>, %246, %cst_139 [0] : vector<16x64xf32> to vector<64xf32>
    %248 = vector.shape_cast %247 : vector<64xf32> to vector<1x64xf32>
    %c96_140 = arith.constant 96 : index
    %c0_141 = arith.constant 0 : index
    %249 = vector.load %arg19[%c96_140, %c0_141] : memref<128x64xf32, #tpu.memory_space<vmem>>, vector<16x64xf32>
    %250 = arith.mulf %249, %244 : vector<16x64xf32>
    %c96_142 = arith.constant 96 : index
    %c0_143 = arith.constant 0 : index
    %251 = vector.load %arg20[%c96_142, %c0_143] : memref<128x64xf32, #tpu.memory_space<vmem>>, vector<16x64xf32>
    %252 = arith.addf %250, %251 : vector<16x64xf32>
    %c96_144 = arith.constant 96 : index
    %c0_145 = arith.constant 0 : index
    %253 = vector.load %arg21[%c96_144, %c0_145] : memref<128x64xf32, #tpu.memory_space<vmem>>, vector<16x64xf32>
    %254 = arith.mulf %252, %253 : vector<16x64xf32>
    %cst_146 = arith.constant dense<0.000000e+00> : vector<64xf32>
    %255 = vector.multi_reduction <add>, %254, %cst_146 [0] : vector<16x64xf32> to vector<64xf32>
    %256 = vector.shape_cast %255 : vector<64xf32> to vector<1x64xf32>
    %c112_147 = arith.constant 112 : index
    %c0_148 = arith.constant 0 : index
    %257 = vector.load %arg19[%c112_147, %c0_148] : memref<128x64xf32, #tpu.memory_space<vmem>>, vector<16x64xf32>
    %258 = arith.mulf %257, %252 : vector<16x64xf32>
    %c112_149 = arith.constant 112 : index
    %c0_150 = arith.constant 0 : index
    %259 = vector.load %arg20[%c112_149, %c0_150] : memref<128x64xf32, #tpu.memory_space<vmem>>, vector<16x64xf32>
    %260 = arith.addf %258, %259 : vector<16x64xf32>
    %c112_151 = arith.constant 112 : index
    %c0_152 = arith.constant 0 : index
    %261 = vector.load %arg21[%c112_151, %c0_152] : memref<128x64xf32, #tpu.memory_space<vmem>>, vector<16x64xf32>
    %262 = arith.mulf %260, %261 : vector<16x64xf32>
    %cst_153 = arith.constant dense<0.000000e+00> : vector<64xf32>
    %263 = vector.multi_reduction <add>, %262, %cst_153 [0] : vector<16x64xf32> to vector<64xf32>
    %264 = vector.shape_cast %263 : vector<64xf32> to vector<1x64xf32>
    %265 = tpu.concatenate %208, %216, %224, %232, %240, %248, %256, %264 in 0 : vector<1x64xf32>, vector<1x64xf32>, vector<1x64xf32>, vector<1x64xf32>, vector<1x64xf32>, vector<1x64xf32>, vector<1x64xf32>, vector<1x64xf32> -> vector<8x64xf32>
    %cst_154 = arith.constant dense<0.000000e+00> : vector<8x64xf32>
    %266 = tpu.matmul %75, %265, %cst_154 {dimension_numbers = #tpu.dot_dimension_numbers<[1], [0], [0], [1], [0, 0, 1, 1], [], []>} : vector<8x8xf32>, vector<8x64xf32>, vector<8x64xf32> -> vector<8x64xf32>
    %267 = vector.extract_strided_slice %265 {offsets = [0, 0], sizes = [8, 16], strides = [1, 1]} : vector<8x64xf32> to vector<8x16xf32>
    %268 = vector.extract_strided_slice %266 {offsets = [0, 16], sizes = [8, 16], strides = [1, 1]} : vector<8x64xf32> to vector<8x16xf32>
    %269 = arith.addf %267, %268 : vector<8x16xf32>
    %270 = vector.extract_strided_slice %265 {offsets = [0, 32], sizes = [8, 16], strides = [1, 1]} : vector<8x64xf32> to vector<8x16xf32>
    %271 = vector.extract_strided_slice %266 {offsets = [0, 48], sizes = [8, 16], strides = [1, 1]} : vector<8x64xf32> to vector<8x16xf32>
    %272 = arith.addf %270, %271 : vector<8x16xf32>
    %273 = tpu.concatenate %269, %272 in 0 : vector<8x16xf32>, vector<8x16xf32> -> vector<16x16xf32>
    %c0_155 = arith.constant 0 : index
    %c0_156 = arith.constant 0 : index
    %274 = vector.load %arg14[%c0_155, %c0_156] : memref<1x16xf32, #tpu.memory_space<vmem>>, vector<1x16xf32>
    %275 = vector.broadcast %274 : vector<1x16xf32> to vector<16x16xf32>
    %276 = arith.mulf %275, %48 : vector<16x16xf32>
    %277 = arith.addf %273, %276 : vector<16x16xf32>
    %cst_157 = arith.constant dense<0.000000e+00> : vector<16xf32>
    %278 = vector.multi_reduction <add>, %277, %cst_157 [1] : vector<16x16xf32> to vector<16xf32>
    %279 = vector.shape_cast %278 : vector<16xf32> to vector<16x1xf32>
    %cst_158 = arith.constant 1.600000e+01 : f32
    %280 = vector.broadcast %cst_158 : f32 to vector<16x1xf32>
    %281 = arith.divf %279, %280 : vector<16x1xf32>
    %282 = vector.broadcast %281 : vector<16x1xf32> to vector<16x16xf32>
    %283 = arith.subf %277, %282 : vector<16x16xf32>
    %284 = arith.mulf %283, %283 : vector<16x16xf32>
    %cst_159 = arith.constant dense<0.000000e+00> : vector<16xf32>
    %285 = vector.multi_reduction <add>, %284, %cst_159 [1] : vector<16x16xf32> to vector<16xf32>
    %286 = vector.shape_cast %285 : vector<16xf32> to vector<16x1xf32>
    %cst_160 = arith.constant 1.600000e+01 : f32
    %287 = vector.broadcast %cst_160 : f32 to vector<16x1xf32>
    %288 = arith.divf %286, %287 : vector<16x1xf32>
    %cst_161 = arith.constant 9.99999974E-6 : f32
    %289 = vector.broadcast %cst_161 : f32 to vector<16x1xf32>
    %290 = arith.addf %288, %289 : vector<16x1xf32>
    %291 = math.rsqrt %290 : vector<16x1xf32>
    %292 = vector.broadcast %291 : vector<16x1xf32> to vector<16x16xf32>
    %293 = arith.mulf %283, %292 : vector<16x16xf32>
    %c0_162 = arith.constant 0 : index
    %c0_163 = arith.constant 0 : index
    %294 = vector.load %arg15[%c0_162, %c0_163] : memref<1x16xf32, #tpu.memory_space<vmem>>, vector<1x16xf32>
    %295 = vector.broadcast %294 : vector<1x16xf32> to vector<16x16xf32>
    %296 = arith.mulf %293, %295 : vector<16x16xf32>
    %c0_164 = arith.constant 0 : index
    %c0_165 = arith.constant 0 : index
    %297 = vector.load %arg16[%c0_164, %c0_165] : memref<1x16xf32, #tpu.memory_space<vmem>>, vector<1x16xf32>
    %298 = vector.broadcast %297 : vector<1x16xf32> to vector<16x16xf32>
    %299 = arith.addf %296, %298 : vector<16x16xf32>
    %300 = arith.negf %26 : vector<16x16xf32>
    %301 = math.exp %300 : vector<16x16xf32>
    %cst_166 = arith.constant 1.000000e+00 : f32
    %302 = vector.broadcast %cst_166 : f32 to vector<16x16xf32>
    %303 = arith.addf %302, %301 : vector<16x16xf32>
    %304 = arith.divf %302, %303 : vector<16x16xf32>
    %305 = arith.mulf %26, %304 : vector<16x16xf32>
    %306 = arith.mulf %299, %305 : vector<16x16xf32>
    %c0_167 = arith.constant 0 : index
    %c0_168 = arith.constant 0 : index
    %307 = vector.load %arg17[%c0_167, %c0_168] : memref<16x32xf32, #tpu.memory_space<vmem>>, vector<16x32xf32>
    %cst_169 = arith.constant dense<0.000000e+00> : vector<16x32xf32>
    %308 = tpu.matmul %306, %307, %cst_169 {dimension_numbers = #tpu.dot_dimension_numbers<[1], [0], [0], [1], [0, 0, 1, 1], [], []>} : vector<16x16xf32>, vector<16x32xf32>, vector<16x32xf32> -> vector<16x32xf32>
    %309 = arith.addf %308, %0 : vector<16x32xf32>
    %c0_170 = arith.constant 0 : index
    %c0_171 = arith.constant 0 : index
    %310 = vector.load %arg18[%c0_170, %c0_171] : memref<16x32xf32, #tpu.memory_space<vmem>>, vector<16x32xf32>
    tpu.vector_store %arg18[%c0_170, %c0_171], %309 {strides = array<i32>} : memref<16x32xf32, #tpu.memory_space<vmem>>, vector<16x32xf32>,
    return
  }
  func.func @transform_0(%arg0: i32) -> (i32, i32) {
    %c0_i32 = arith.constant 0 : i32
    %c0_i32_0 = arith.constant 0 : i32
    %c0_i32_1 = arith.constant 0 : i32
    return %c0_i32, %c0_i32_0 : i32, i32
  }
  func.func @transform_1(%arg0: i32) -> (i32, i32) {
    %c0_i32 = arith.constant 0 : i32
    %c0_i32_0 = arith.constant 0 : i32
    %c0_i32_1 = arith.constant 0 : i32
    return %c0_i32, %c0_i32_0 : i32, i32
  }
  func.func @transform_2(%arg0: i32) -> (i32, i32) {
    %c0_i32 = arith.constant 0 : i32
    %c0_i32_0 = arith.constant 0 : i32
    %c0_i32_1 = arith.constant 0 : i32
    return %c0_i32, %c0_i32_0 : i32, i32
  }
  func.func @transform_3(%arg0: i32) -> (i32, i32) {
    %c0_i32 = arith.constant 0 : i32
    %c0_i32_0 = arith.constant 0 : i32
    %c0_i32_1 = arith.constant 0 : i32
    return %c0_i32, %c0_i32_0 : i32, i32
  }
  func.func @transform_4(%arg0: i32) -> (i32, i32) {
    %c0_i32 = arith.constant 0 : i32
    %c0_i32_0 = arith.constant 0 : i32
    %c0_i32_1 = arith.constant 0 : i32
    return %c0_i32, %c0_i32_0 : i32, i32
  }
  func.func @transform_5(%arg0: i32) -> (i32, i32) {
    %c0_i32 = arith.constant 0 : i32
    %c0_i32_0 = arith.constant 0 : i32
    %c0_i32_1 = arith.constant 0 : i32
    return %c0_i32, %c0_i32_0 : i32, i32
  }
  func.func @transform_6(%arg0: i32) -> (i32, i32) {
    %c0_i32 = arith.constant 0 : i32
    %c0_i32_0 = arith.constant 0 : i32
    %c0_i32_1 = arith.constant 0 : i32
    return %c0_i32, %c0_i32_0 : i32, i32
  }
  func.func @transform_7(%arg0: i32) -> (i32, i32) {
    %c0_i32 = arith.constant 0 : i32
    %c0_i32_0 = arith.constant 0 : i32
    %c0_i32_1 = arith.constant 0 : i32
    return %c0_i32, %c0_i32_0 : i32, i32
  }
  func.func @transform_8(%arg0: i32) -> (i32, i32) {
    %c0_i32 = arith.constant 0 : i32
    %c0_i32_0 = arith.constant 0 : i32
    %c0_i32_1 = arith.constant 0 : i32
    return %c0_i32, %c0_i32_0 : i32, i32
  }
  func.func @transform_9(%arg0: i32) -> (i32, i32) {
    %c0_i32 = arith.constant 0 : i32
    %c0_i32_0 = arith.constant 0 : i32
    %c0_i32_1 = arith.constant 0 : i32
    return %c0_i32, %c0_i32_0 : i32, i32
  }
  func.func @transform_10(%arg0: i32) -> (i32, i32) {
    %c0_i32 = arith.constant 0 : i32
    %c0_i32_0 = arith.constant 0 : i32
    %c0_i32_1 = arith.constant 0 : i32
    return %c0_i32, %c0_i32_0 : i32, i32
  }
  func.func @transform_11(%arg0: i32) -> (i32, i32) {
    %c0_i32 = arith.constant 0 : i32
    %c0_i32_0 = arith.constant 0 : i32
    %c0_i32_1 = arith.constant 0 : i32
    return %c0_i32, %c0_i32_0 : i32, i32
  }
  func.func @transform_12(%arg0: i32) -> (i32, i32) {
    %c0_i32 = arith.constant 0 : i32
    %c0_i32_0 = arith.constant 0 : i32
    %c0_i32_1 = arith.constant 0 : i32
    return %c0_i32, %c0_i32_0 : i32, i32
  }
  func.func @transform_13(%arg0: i32) -> (i32, i32) {
    %c0_i32 = arith.constant 0 : i32
    %c0_i32_0 = arith.constant 0 : i32
    %c0_i32_1 = arith.constant 0 : i32
    return %c0_i32, %c0_i32_0 : i32, i32
  }
  func.func @transform_14(%arg0: i32) -> (i32, i32) {
    %c0_i32 = arith.constant 0 : i32
    %c0_i32_0 = arith.constant 0 : i32
    %c0_i32_1 = arith.constant 0 : i32
    return %c0_i32, %c0_i32_0 : i32, i32
  }
  func.func @transform_15(%arg0: i32) -> (i32, i32) {
    %c0_i32 = arith.constant 0 : i32
    %c0_i32_0 = arith.constant 0 : i32
    %c0_i32_1 = arith.constant 0 : i32
    return %c0_i32, %c0_i32_0 : i32, i32
  }
  func.func @transform_16(%arg0: i32) -> (i32, i32) {
    %c0_i32 = arith.constant 0 : i32
    %c0_i32_0 = arith.constant 0 : i32
    %c0_i32_1 = arith.constant 0 : i32
    return %c0_i32, %c0_i32_0 : i32, i32
  }
  func.func @transform_17(%arg0: i32) -> (i32, i32) {
    %c0_i32 = arith.constant 0 : i32
    %c0_i32_0 = arith.constant 0 : i32
    %c0_i32_1 = arith.constant 0 : i32
    return %c0_i32, %c0_i32_0 : i32, i32
  }
}

</mosaic_0001>

<llo_original>
// kernel: spec_mamba_block_forward.1
$region0: #{spec_mamba_block_forward.1}
  #allocation0 [shape = 'u32[]', space=smem, size = 0x4, offset = 0x4, fixed_abs, tag = 'smem constant byte address 0x4 - core index']
  #allocation1 [shape = 'u32[72,128]{1,0:T(1,128)}', space=vmem, size = 0x9000, scoped, tag = 'internal scratch']
  #allocation2 [shape = 'f32[128,64]{1,0:T(8,128)}', space=vmem, size = 0x10000, scoped, tag = 'scratch operand']
  #allocation3 [shape = 'f32[128,64]{1,0:T(8,128)}', space=vmem, size = 0x10000, scoped, tag = 'scratch operand']
  #allocation4 [shape = 'f32[128,64]{1,0:T(8,128)}', space=vmem, size = 0x10000, scoped, tag = 'scratch operand']
  %s0 = inlined_call_operand.vmem [shape: f32[16,32], index: 0, kind: input, shape index: {}]
  %s1 = inlined_call_operand.vmem [shape: f32[1,32], index: 1, kind: input, shape index: {}]
  %s2 = inlined_call_operand.vmem [shape: f32[1,32], index: 2, kind: input, shape index: {}]
  %s3 = inlined_call_operand.vmem [shape: f32[32,32], index: 3, kind: input, shape index: {}]
  %s4 = inlined_call_operand.vmem [shape: f32[16,16], index: 4, kind: input, shape index: {}]
  %s5 = inlined_call_operand.vmem [shape: f32[16,16], index: 5, kind: input, shape index: {}]
  %s6 = inlined_call_operand.vmem [shape: f32[64,16], index: 6, kind: input, shape index: {}]
  %s7 = inlined_call_operand.vmem [shape: f32[16,32], index: 7, kind: input, shape index: {}]
  %s8 = inlined_call_operand.vmem [shape: f32[1,32], index: 8, kind: input, shape index: {}]
  %s9 = inlined_call_operand.vmem [shape: f32[16,64], index: 9, kind: input, shape index: {}]
  %s10 = inlined_call_operand.vmem [shape: f32[1,64], index: 10, kind: input, shape index: {}]
  %s11 = inlined_call_operand.vmem [shape: f32[8,8], index: 11, kind: input, shape index: {}]
  %s12 = inlined_call_operand.vmem [shape: f32[256,64], index: 12, kind: input, shape index: {}]
  %s13 = inlined_call_operand.vmem [shape: f32[1,16], index: 13, kind: input, shape index: {}]
  %s14 = inlined_call_operand.vmem [shape: f32[1,16], index: 14, kind: input, shape index: {}]
  %s15 = inlined_call_operand.vmem [shape: f32[1,16], index: 15, kind: input, shape index: {}]
  %s16 = inlined_call_operand.vmem [shape: f32[16,32], index: 16, kind: input, shape index: {}]
  %s17 = inlined_call_operand.vmem [shape: f32[16,32], index: 17, kind: output, shape index: {}]
  %s18 = sld [smem:[#allocation0]]
  $region78: #{spec_mamba_block_forward.1} parent=0
    _
  %s20 = ssub.s32 1, %s18
  %s21 = scalar_select 0, %s20, %s18
  // Predicated region
  $region2: #{spec_mamba_block_forward.1} parent=0 // pred_check
    _
  $region3: #{spec_mamba_block_forward.1} parent=0 // pred_check_branch
    %23 = sbr.rel (0) target = $region5
  $region4: #{spec_mamba_block_forward.1} parent=0 // pred_region
    _
  $region5: #{spec_mamba_block_forward.1} parent=0 // pred_fallthru
    _
  // Predicated region
  $region6: #{spec_mamba_block_forward.1} parent=0 // pred_check
    _
  $region7: #{spec_mamba_block_forward.1} parent=0 // pred_check_branch
    %25 = sbr.rel (0) target = $region9
  $region8: #{spec_mamba_block_forward.1} parent=0 // pred_region
    _
  $region9: #{spec_mamba_block_forward.1} parent=0 // pred_fallthru
    _
  // Predicated region
  $region10: #{spec_mamba_block_forward.1} parent=0 // pred_check
    _
  $region11: #{spec_mamba_block_forward.1} parent=0 // pred_check_branch
    %27 = sbr.rel (0) target = $region13
  $region12: #{spec_mamba_block_forward.1} parent=0 // pred_region
    _
  $region13: #{spec_mamba_block_forward.1} parent=0 // pred_fallthru
    _
  // Predicated region
  $region14: #{spec_mamba_block_forward.1} parent=0 // pred_check
    _
  $region15: #{spec_mamba_block_forward.1} parent=0 // pred_check_branch
    %29 = sbr.rel (0) target = $region17
  $region16: #{spec_mamba_block_forward.1} parent=0 // pred_region
    _
  $region17: #{spec_mamba_block_forward.1} parent=0 // pred_fallthru
    _
  // Predicated region
  $region18: #{spec_mamba_block_forward.1} parent=0 // pred_check
    _
  $region19: #{spec_mamba_block_forward.1} parent=0 // pred_check_branch
    %31 = sbr.rel (0) target = $region21
  $region20: #{spec_mamba_block_forward.1} parent=0 // pred_region
    _
  $region21: #{spec_mamba_block_forward.1} parent=0 // pred_fallthru
    _
  // Predicated region
  $region22: #{spec_mamba_block_forward.1} parent=0 // pred_check
    _
  $region23: #{spec_mamba_block_forward.1} parent=0 // pred_check_branch
    %33 = sbr.rel (0) target = $region25
  $region24: #{spec_mamba_block_forward.1} parent=0 // pred_region
    _
  $region25: #{spec_mamba_block_forward.1} parent=0 // pred_fallthru
    _
  // Predicated region
  $region26: #{spec_mamba_block_forward.1} parent=0 // pred_check
    _
  $region27: #{spec_mamba_block_forward.1} parent=0 // pred_check_branch
    %35 = sbr.rel (0) target = $region29
  $region28: #{spec_mamba_block_forward.1} parent=0 // pred_region
    _
  $region29: #{spec_mamba_block_forward.1} parent=0 // pred_fallthru
    _
  // Predicated region
  $region30: #{spec_mamba_block_forward.1} parent=0 // pred_check
    _
  $region31: #{spec_mamba_block_forward.1} parent=0 // pred_check_branch
    %37 = sbr.rel (0) target = $region33
  $region32: #{spec_mamba_block_forward.1} parent=0 // pred_region
    _
  $region33: #{spec_mamba_block_forward.1} parent=0 // pred_fallthru
    _
  // Predicated region
  $region34: #{spec_mamba_block_forward.1} parent=0 // pred_check
    _
  $region35: #{spec_mamba_block_forward.1} parent=0 // pred_check_branch
    %39 = sbr.rel (0) target = $region37
  $region36: #{spec_mamba_block_forward.1} parent=0 // pred_region
    _
  $region37: #{spec_mamba_block_forward.1} parent=0 // pred_fallthru
    _
  // Predicated region
  $region38: #{spec_mamba_block_forward.1} parent=0 // pred_check
    _
  $region39: #{spec_mamba_block_forward.1} parent=0 // pred_check_branch
    %41 = sbr.rel (0) target = $region41
  $region40: #{spec_mamba_block_forward.1} parent=0 // pred_region
    _
  $region41: #{spec_mamba_block_forward.1} parent=0 // pred_fallthru
    _
  // Predicated region
  $region42: #{spec_mamba_block_forward.1} parent=0 // pred_check
    _
  $region43: #{spec_mamba_block_forward.1} parent=0 // pred_check_branch
    %43 = sbr.rel (0) target = $region45
  $region44: #{spec_mamba_block_forward.1} parent=0 // pred_region
    _
  $region45: #{spec_mamba_block_forward.1} parent=0 // pred_fallthru
    _
  // Predicated region
  $region46: #{spec_mamba_block_forward.1} parent=0 // pred_check
    _
  $region47: #{spec_mamba_block_forward.1} parent=0 // pred_check_branch
    %45 = sbr.rel (0) target = $region49
  $region48: #{spec_mamba_block_forward.1} parent=0 // pred_region
    _
  $region49: #{spec_mamba_block_forward.1} parent=0 // pred_fallthru
    _
  // Predicated region
  $region50: #{spec_mamba_block_forward.1} parent=0 // pred_check
    _
  $region51: #{spec_mamba_block_forward.1} parent=0 // pred_check_branch
    %47 = sbr.rel (0) target = $region53
  $region52: #{spec_mamba_block_forward.1} parent=0 // pred_region
    _
  $region53: #{spec_mamba_block_forward.1} parent=0 // pred_fallthru
    _
  // Predicated region
  $region54: #{spec_mamba_block_forward.1} parent=0 // pred_check
    _
  $region55: #{spec_mamba_block_forward.1} parent=0 // pred_check_branch
    %49 = sbr.rel (0) target = $region57
  $region56: #{spec_mamba_block_forward.1} parent=0 // pred_region
    _
  $region57: #{spec_mamba_block_forward.1} parent=0 // pred_fallthru
    _
  // Predicated region
  $region58: #{spec_mamba_block_forward.1} parent=0 // pred_check
    _
  $region59: #{spec_mamba_block_forward.1} parent=0 // pred_check_branch
    %51 = sbr.rel (0) target = $region61
  $region60: #{spec_mamba_block_forward.1} parent=0 // pred_region
    _
  $region61: #{spec_mamba_block_forward.1} parent=0 // pred_fallthru
    _
  // Predicated region
  $region62: #{spec_mamba_block_forward.1} parent=0 // pred_check
    _
  $region63: #{spec_mamba_block_forward.1} parent=0 // pred_check_branch
    %53 = sbr.rel (0) target = $region65
  $region64: #{spec_mamba_block_forward.1} parent=0 // pred_region
    _
  $region65: #{spec_mamba_block_forward.1} parent=0 // pred_fallthru
    _
  // Predicated region
  $region66: #{spec_mamba_block_forward.1} parent=0 // pred_check
    _
  $region67: #{spec_mamba_block_forward.1} parent=0 // pred_check_branch
    %55 = sbr.rel (0) target = $region69
  $region68: #{spec_mamba_block_forward.1} parent=0 // pred_region
    _
  $region69: #{spec_mamba_block_forward.1} parent=0 // pred_fallthru
    _
  %v56 = vld [vmem:[%s0] sm:$0xff]
  %v57 = vld [vmem:[%s0 + $0x8] sm:$0xff]
  %vm58 = vcmask 261120
  %v59 = vsel %vm58, %v56, 0.0
  %60 = vadd.xlane.f32.xlu0 %v59
  %v61 = vpop.xlane.xlu0 %60
  %v62 = vsel %vm58, %v57, 0.0
  %63 = vadd.xlane.f32.xlu0 %v62
  %v64 = vpop.xlane.xlu0 %63
  %v65 = vrcp.pop 32.0
  %v66 = vmul.f32 32.0, %v65
  %v67 = vsub.f32 1.0, %v66
  %v68 = vmul.f32 %v65, %v67
  %v69 = vadd.f32 %v65, %v68
  %vm70 = vweird.f32 %v65
  %v71 = vsel %vm70, %v65, %v69
  %v72 = vmul.f32 %v61, %v71
  %v73 = vmul.f32 %v64, %v71
  %v74 = vsub.f32 %v56, %v72
  %v75 = vsub.f32 %v57, %v73
  %v76 = vmul.f32 %v74, %v74
  %v77 = vmul.f32 %v75, %v75
  %v78 = vsel %vm58, %v76, 0.0
  %79 = vadd.xlane.f32.xlu0 %v78
  %v80 = vpop.xlane.xlu0 %79
  %v81 = vsel %vm58, %v77, 0.0
  %82 = vadd.xlane.f32.xlu0 %v81
  %v83 = vpop.xlane.xlu0 %82
  %v84 = vmul.f32 %v80, %v71
  %v85 = vmul.f32 %v83, %v71
  %v86 = vadd.f32 %v84, 1e-06
  %v87 = vadd.f32 %v85, 1e-06
  %v88 = vrsqrt.pop %v86
  %v89 = vmul.f32 %v88, %v86
  %v90 = vmul.f32 %v89, %v88
  %v91 = vmul.f32 0.5, %v90
  %v92 = vsub.f32 1.5, %v91
  %v93 = vmul.f32 %v88, %v92
  %vm94 = vweird.f32 %v86
  %vm95 = vweird.f32 %v88
  %vm96 = vmor %vm94, %vm95
  %v97 = vsel %vm96, %v88, %v93
  %v98 = vrsqrt.pop %v87
  %v99 = vmul.f32 %v98, %v87
  %v100 = vmul.f32 %v99, %v98
  %v101 = vmul.f32 0.5, %v100
  %v102 = vsub.f32 1.5, %v101
  %v103 = vmul.f32 %v98, %v102
  %vm104 = vweird.f32 %v87
  %vm105 = vweird.f32 %v98
  %vm106 = vmor %vm104, %vm105
  %v107 = vsel %vm106, %v98, %v103
  %v108 = vmul.f32 %v74, %v97
  %v109 = vmul.f32 %v75, %v107
  %v110 = vld [vmem:[%s1] sm:$0x1]
  %v112 = vperm.slane %v110, 0
  %v114 = vmul.f32 %v108, %v112
  %v115 = vmul.f32 %v109, %v112
  %v116 = vld [vmem:[%s2] sm:$0x1]
  %v118 = vperm.slane %v116, 0
  %v120 = vadd.f32 %v114, %v118
  %v121 = vadd.f32 %v115, %v118
  %v122 = vld [vmem:[%s3] sm:$0xff]
  %v123 = vld [vmem:[%s3 + $0x8] sm:$0xff]
  %v124 = vld [vmem:[%s3 + $0x10] sm:$0xff]
  %v125 = vld [vmem:[%s3 + $0x18] sm:$0xff]
  %v127 = vsel %vm58, %v120, 0
  %v130 = vsel %vm58, %v121, 0
  %132 = vmatpush.msra.mxu0 0.0
  %133 = vmatpush.msra.mxu0 0.0
  %134 = vmatpush.msra.mxu0 0.0
  %135 = vmatpush.msra.mxu0 0.0
  %136 = vmatpush.msra.mxu0 0.0
  %137 = vmatpush.msra.mxu0 0.0
  %138 = vmatpush.msra.mxu0 0.0
  %139 = vmatpush.msra.mxu0 0.0
  %140 = vmatpush.msra.mxu0 0.0
  %141 = vmatpush.msra.mxu0 0.0
  %142 = vmatpush.msra.mxu0 0.0
  %143 = vmatpush.msra.mxu0 0.0
  %144 = vmatpush.msra.mxu0 %v125
  %145 = vmatpush.msra.mxu0 %v124
  %146 = vmatpush.msra.mxu0 %v123
  %147 = vmatpush.msra.mxu0 %v122
  %148 = vmatmul.f32.gmra.mxu0 %v127
  %v149 = vpop.f32.mrf.mxu0
  %v150 = vadd.f32 0.0, %v149
  %151 = vmatmul.f32.gmra.mxu0 %v130
  %v152 = vpop.f32.mrf.mxu0
  %v153 = vadd.f32 0.0, %v152
  %154 = vdwg.mxu0
  %v155 = vld [vmem:[%s4] sm:$0xff]
  %v156 = vld [vmem:[%s4 + $0x8] sm:$0xff]
  %vm157 = vcmask 130048
  %v159 = vsel %vm157, %v150, 0
  %v162 = vsel %vm157, %v153, 0
  %164 = vmatpush.msra.mxu0 0.0
  %165 = vmatpush.msra.mxu0 0.0
  %166 = vmatpush.msra.mxu0 0.0
  %167 = vmatpush.msra.mxu0 0.0
  %168 = vmatpush.msra.mxu0 0.0
  %169 = vmatpush.msra.mxu0 0.0
  %170 = vmatpush.msra.mxu0 0.0
  %171 = vmatpush.msra.mxu0 0.0
  %172 = vmatpush.msra.mxu0 0.0
  %173 = vmatpush.msra.mxu0 0.0
  %174 = vmatpush.msra.mxu0 0.0
  %175 = vmatpush.msra.mxu0 0.0
  %176 = vmatpush.msra.mxu0 0.0
  %177 = vmatpush.msra.mxu0 0.0
  %178 = vmatpush.msra.mxu0 %v156
  %179 = vmatpush.msra.mxu0 %v155
  %180 = vmatmul.f32.gmra.mxu0 %v159
  %v181 = vpop.f32.mrf.mxu0
  %v182 = vadd.f32 0.0, %v181
  %183 = vmatmul.f32.gmra.mxu0 %v162
  %v184 = vpop.f32.mrf.mxu0
  %v185 = vadd.f32 0.0, %v184
  %186 = vdwg.mxu0
  %v187 = vxor.u32 %v182, 2147483648
  %v188 = vxor.u32 %v185, 2147483648
  %v189 = vmul.f32 %v187, 1.442695
  %v190 = vpow.pop %v189
  %v191 = vmul.f32 %v188, 1.442695
  %v192 = vpow.pop %v191
  %v193 = vadd.f32 %v190, 1.0
  %v194 = vadd.f32 %v192, 1.0
  %v195 = vrcp.pop %v193
  %v196 = vmul.f32 %v193, %v195
  %v197 = vsub.f32 1.0, %v196
  %v198 = vmul.f32 %v195, %v197
  %v199 = vadd.f32 %v195, %v198
  %vm200 = vweird.f32 %v193
  %vm201 = vweird.f32 %v195
  %vm202 = vmor %vm200, %vm201
  %v203 = vsel %vm202, %v195, %v199
  %v204 = vand.u32 2147483647, %v193
  %vm205 = vcmp.eq.f32.partialorder %v204, 8.507059e+37
  %v206 = vand.u32 %v193, 2147483648
  %v207 = vor.u32 1.1754944e-38, %v206
  %v208 = vsel %vm205, %v207, %v203
  %v209 = vmul.f32 1.0, %v208
  %v210 = vrcp.pop %v194
  %v211 = vmul.f32 %v194, %v210
  %v212 = vsub.f32 1.0, %v211
  %v213 = vmul.f32 %v210, %v212
  %v214 = vadd.f32 %v210, %v213
  %vm215 = vweird.f32 %v194
  %vm216 = vweird.f32 %v210
  %vm217 = vmor %vm215, %vm216
  %v218 = vsel %vm217, %v210, %v214
  %v219 = vand.u32 2147483647, %v194
  %vm220 = vcmp.eq.f32.partialorder %v219, 8.507059e+37
  %v221 = vand.u32 %v194, 2147483648
  %v222 = vor.u32 1.1754944e-38, %v221
  %v223 = vsel %vm220, %v222, %v218
  %v224 = vmul.f32 1.0, %v223
  %v225 = vmul.f32 %v182, %v209
  %v226 = vmul.f32 %v185, %v224
  %228 = vrot.lane.b32.xlu0 %v225, 120
  %v229 = vpop.permute.xlu0 %228
  %232 = vrot.lane.b32.xlu0 %v226, 120
  %v233 = vpop.permute.xlu0 %232
  %234 = vrot.lane.b32.xlu0 %v226, 8
  %v235 = vpop.permute.xlu0 %234
  %236 = vrot.lane.b32.xlu0 %v233, 8
  %v237 = vpop.permute.xlu0 %236
  %vm240 = vcmask 64512
  %v241 = vsel %vm240, %v225, %v235
  %v242 = vsel %vm240, %v229, %v237
  %v243 = vld [vmem:[%s6] sm:$0xff]
  %v244 = vld [vmem:[%s6 + $0x8] sm:$0xff]
  %v245 = vld [vmem:[%s6 + $0x10] sm:$0xff]
  %v246 = vld [vmem:[%s6 + $0x18] sm:$0xff]
  %v247 = vld [vmem:[%s6 + $0x20] sm:$0xff]
  %v248 = vld [vmem:[%s6 + $0x28] sm:$0xff]
  %v249 = vld [vmem:[%s6 + $0x30] sm:$0xff]
  %v250 = vld [vmem:[%s6 + $0x38] sm:$0xff]
  %v252 = vsel %vm157, %v243, 0
  %v255 = vsel %vm157, %v244, 0
  %v258 = vsel %vm157, %v245, 0
  %v261 = vsel %vm157, %v246, 0
  %v264 = vsel %vm157, %v247, 0
  %v267 = vsel %vm157, %v248, 0
  %v270 = vsel %vm157, %v249, 0
  %v273 = vsel %vm157, %v250, 0
  %275 = vmatpush.msra.mxu0 0.0
  %276 = vmatpush.msra.mxu0 0.0
  %277 = vmatpush.msra.mxu0 0.0
  %278 = vmatpush.msra.mxu0 0.0
  %279 = vmatpush.msra.mxu0 0.0
  %280 = vmatpush.msra.mxu0 0.0
  %281 = vmatpush.msra.mxu0 0.0
  %282 = vmatpush.msra.mxu0 0.0
  %283 = vmatpush.msra.mxu0 0.0
  %284 = vmatpush.msra.mxu0 0.0
  %285 = vmatpush.msra.mxu0 0.0
  %286 = vmatpush.msra.mxu0 0.0
  %287 = vmatpush.msra.mxu0 0.0
  %288 = vmatpush.msra.mxu0 0.0
  %289 = vmatpush.msra.mxu0 %v242
  %290 = vmatpush.msra.mxu0 %v241
  %291 = vmatmul.f32.gmra.mxu0 %v252
  %v292 = vpop.f32.mrf.mxu0
  %v293 = vadd.f32 0.0, %v292
  %294 = vmatmul.f32.gmra.mxu0 %v255
  %v295 = vpop.f32.mrf.mxu0
  %v296 = vadd.f32 0.0, %v295
  %297 = vmatmul.f32.gmra.mxu0 %v258
  %v298 = vpop.f32.mrf.mxu0
  %v299 = vadd.f32 0.0, %v298
  %300 = vmatmul.f32.gmra.mxu0 %v261
  %v301 = vpop.f32.mrf.mxu0
  %v302 = vadd.f32 0.0, %v301
  %303 = vmatmul.f32.gmra.mxu0 %v264
  %v304 = vpop.f32.mrf.mxu0
  %v305 = vadd.f32 0.0, %v304
  %306 = vmatmul.f32.gmra.mxu0 %v267
  %v307 = vpop.f32.mrf.mxu0
  %v308 = vadd.f32 0.0, %v307
  %309 = vmatmul.f32.gmra.mxu0 %v270
  %v310 = vpop.f32.mrf.mxu0
  %v311 = vadd.f32 0.0, %v310
  %312 = vmatmul.f32.gmra.mxu0 %v273
  %v313 = vpop.f32.mrf.mxu0
  %v314 = vadd.f32 0.0, %v313
  %315 = vdwg.mxu0
  %316 = vxpose.xlu0.b32.start [1/16] %v241, 128
  %317 = vxpose.xlu0.b32.cont [2/16] %v242, 128
  %318 = vxpose.xlu0.b32.cont [3/16] 0.0, 128
  %319 = vxpose.xlu0.b32.cont [4/16] 0.0, 128
  %320 = vxpose.xlu0.b32.cont [5/16] 0.0, 128
  %321 = vxpose.xlu0.b32.cont [6/16] 0.0, 128
  %322 = vxpose.xlu0.b32.cont [7/16] 0.0, 128
  %323 = vxpose.xlu0.b32.cont [8/16] 0.0, 128
  %324 = vxpose.xlu0.b32.cont [9/16] 0.0, 128
  %325 = vxpose.xlu0.b32.cont [10/16] 0.0, 128
  %326 = vxpose.xlu0.b32.cont [11/16] 0.0, 128
  %327 = vxpose.xlu0.b32.cont [12/16] 0.0, 128
  %328 = vxpose.xlu0.b32.cont [13/16] 0.0, 128
  %329 = vxpose.xlu0.b32.cont [14/16] 0.0, 128
  %330 = vxpose.xlu0.b32.cont [15/16] 0.0, 128
  %331 = vxpose.xlu0.b32.end [16/16] 0.0, 128
  %v332 = vpop.trf.xlu0
  %v333 = vpop.trf.xlu0
  %v334 = vpop.trf.xlu0
  %v335 = vpop.trf.xlu0
  %v336 = vpop.trf.xlu0
  %v337 = vpop.trf.xlu0
  %v338 = vpop.trf.xlu0
  %v339 = vpop.trf.xlu0
  %v340 = vpop.trf.xlu0
  %v341 = vpop.trf.xlu0
  %v342 = vpop.trf.xlu0
  %v343 = vpop.trf.xlu0
  %v344 = vpop.trf.xlu0
  %v345 = vpop.trf.xlu0
  %v346 = vpop.trf.xlu0
  %v347 = vpop.trf.xlu0
  %v348 = vld [vmem:[%s5] sm:$0xff]
  %v349 = vld [vmem:[%s5 + $0x8] sm:$0xff]
  %v351 = vsel %vm157, %v332, 0
  %v354 = vsel %vm157, %v333, 0
  %356 = vmatpush.msra.mxu0 0.0
  %357 = vmatpush.msra.mxu0 0.0
  %358 = vmatpush.msra.mxu0 0.0
  %359 = vmatpush.msra.mxu0 0.0
  %360 = vmatpush.msra.mxu0 0.0
  %361 = vmatpush.msra.mxu0 0.0
  %362 = vmatpush.msra.mxu0 0.0
  %363 = vmatpush.msra.mxu0 0.0
  %364 = vmatpush.msra.mxu0 0.0
  %365 = vmatpush.msra.mxu0 0.0
  %366 = vmatpush.msra.mxu0 0.0
  %367 = vmatpush.msra.mxu0 0.0
  %368 = vmatpush.msra.mxu0 0.0
  %369 = vmatpush.msra.mxu0 0.0
  %370 = vmatpush.msra.mxu0 %v349
  %371 = vmatpush.msra.mxu0 %v348
  %372 = vmatmul.f32.gmra.mxu0 %v351
  %v373 = vpop.f32.mrf.mxu0
  %v374 = vadd.f32 0.0, %v373
  %375 = vmatmul.f32.gmra.mxu0 %v354
  %v376 = vpop.f32.mrf.mxu0
  %v377 = vadd.f32 0.0, %v376
  %378 = vdwg.mxu0
  %v379 = vld [vmem:[%s7] sm:$0xff]
  %v380 = vld [vmem:[%s7 + $0x8] sm:$0xff]
  %v381 = vld [vmem:[%s8] sm:$0x1]
  %v383 = vperm.slane %v381, 0
  %v386 = vsel %vm157, %v374, 0
  %v389 = vsel %vm157, %v377, 0
  %391 = vmatpush.msra.mxu0 0.0
  %392 = vmatpush.msra.mxu0 0.0
  %393 = vmatpush.msra.mxu0 0.0
  %394 = vmatpush.msra.mxu0 0.0
  %395 = vmatpush.msra.mxu0 0.0
  %396 = vmatpush.msra.mxu0 0.0
  %397 = vmatpush.msra.mxu0 0.0
  %398 = vmatpush.msra.mxu0 0.0
  %399 = vmatpush.msra.mxu0 0.0
  %400 = vmatpush.msra.mxu0 0.0
  %401 = vmatpush.msra.mxu0 0.0
  %402 = vmatpush.msra.mxu0 0.0
  %403 = vmatpush.msra.mxu0 0.0
  %404 = vmatpush.msra.mxu0 0.0
  %405 = vmatpush.msra.mxu0 %v380
  %406 = vmatpush.msra.mxu0 %v379
  %407 = vmatmul.f32.gmra.mxu0 %v386
  %v408 = vpop.f32.mrf.mxu0
  %v409 = vadd.f32 %v383, %v408
  %410 = vmatmul.f32.gmra.mxu0 %v389
  %v411 = vpop.f32.mrf.mxu0
  %v412 = vadd.f32 %v383, %v411
  %413 = vdwg.mxu0
  %vm414 = vcmp.gt.f32.partialorder %v409, 20.0
  %vm415 = vcmp.gt.f32.partialorder %v412, 20.0
  %v416 = vmul.f32 %v409, 1.442695
  %v417 = vpow.pop %v416
  %v418 = vmul.f32 %v412, 1.442695
  %v419 = vpow.pop %v418
  %v420 = vadd.f32 %v417, 1.0
  %v421 = vlog2.pop %v420
  %v422 = vmul.f32 %v421, 0.6931472
  %v423 = vmul.f32 -0.5, %v417
  %v424 = vadd.f32 %v423, 1.0
  %v425 = vmul.f32 %v424, %v417
  %v426 = vand.u32 2147483647, %v417
  %vm427 = vcmp.lt.f32.partialorder %v426, 0.0004427343
  %v428 = vsel %vm427, %v425, %v422
  %v429 = vadd.f32 %v419, 1.0
  %v430 = vlog2.pop %v429
  %v431 = vmul.f32 %v430, 0.6931472
  %v432 = vmul.f32 -0.5, %v419
  %v433 = vadd.f32 %v432, 1.0
  %v434 = vmul.f32 %v433, %v419
  %v435 = vand.u32 2147483647, %v419
  %vm436 = vcmp.lt.f32.partialorder %v435, 0.0004427343
  %v437 = vsel %vm436, %v434, %v431
  %v438 = vsel %vm414, %v409, %v428
  %v439 = vsel %vm415, %v412, %v437
  %442 = vrot.lane.b32.xlu0 %v299, 16
  %v443 = vpop.permute.xlu0 %442
  %444 = vrot.lane.b32.xlu0 %v302, 16
  %v445 = vpop.permute.xlu0 %444
  %v448 = vsel %vm157, %v293, %v443
  %v449 = vsel %vm157, %v296, %v445
  %452 = vrot.lane.b32.xlu0 %v311, 16
  %v453 = vpop.permute.xlu0 %452
  %454 = vrot.lane.b32.xlu0 %v314, 16
  %v455 = vpop.permute.xlu0 %454
  %v458 = vsel %vm157, %v305, %v453
  %v459 = vsel %vm157, %v308, %v455
  %461 = vrot.lane.b32.xlu0 %v439, 32
  %v462 = vpop.permute.xlu0 %461
  %v464 = vsel %vm58, %v438, %v462
  %465 = vrot.lane.b32.xlu0 %v374, 16
  %v466 = vpop.permute.xlu0 %465
  %468 = vrot.lane.b32.xlu0 %v377, 32
  %v469 = vpop.permute.xlu0 %468
  %471 = vrot.lane.b32.xlu0 %v377, 48
  %v472 = vpop.permute.xlu0 %471
  %v474 = vsel %vm157, %v374, %v466
  %v475 = vsel %vm58, %v474, %v469
  %vm476 = vcmask 392192
  %v477 = vsel %vm476, %v475, %v472
  %v478 = vmul.f32 %v464, %v477
  %v479 = vld [vmem:[%s11] sm:$0xff]
  %v480 = vld [vmem:[%s10] sm:$0x1]
  %v482 = vsel %vm240, %v479, 0
  %484 = vmatpush.msra.mxu0 0.0
  %485 = vmatpush.msra.mxu0 0.0
  %486 = vmatpush.msra.mxu0 0.0
  %487 = vmatpush.msra.mxu0 0.0
  %488 = vmatpush.msra.mxu0 0.0
  %489 = vmatpush.msra.mxu0 0.0
  %490 = vmatpush.msra.mxu0 0.0
  %491 = vmatpush.msra.mxu0 0.0
  %492 = vmatpush.msra.mxu0 0.0
  %493 = vmatpush.msra.mxu0 0.0
  %494 = vmatpush.msra.mxu0 0.0
  %495 = vmatpush.msra.mxu0 0.0
  %496 = vmatpush.msra.mxu0 0.0
  %497 = vmatpush.msra.mxu0 0.0
  %498 = vmatpush.msra.mxu0 0.0
  %499 = vmatpush.msra.mxu0 %v464
  %500 = vmatmul.f32.gmra.mxu0 %v482
  %v501 = vpop.f32.mrf.mxu0
  %v502 = vadd.f32 0.0, %v501
  %503 = vdwg.mxu0
  %504 = vmatpush.msra.mxu0 0.0
  %505 = vmatpush.msra.mxu0 0.0
  %506 = vmatpush.msra.mxu0 0.0
  %507 = vmatpush.msra.mxu0 0.0
  %508 = vmatpush.msra.mxu0 0.0
  %509 = vmatpush.msra.mxu0 0.0
  %510 = vmatpush.msra.mxu0 0.0
  %511 = vmatpush.msra.mxu0 0.0
  %512 = vmatpush.msra.mxu0 0.0
  %513 = vmatpush.msra.mxu0 0.0
  %514 = vmatpush.msra.mxu0 0.0
  %515 = vmatpush.msra.mxu0 0.0
  %516 = vmatpush.msra.mxu0 0.0
  %517 = vmatpush.msra.mxu0 0.0
  %518 = vmatpush.msra.mxu0 0.0
  %519 = vmatpush.msra.mxu0 %v478
  %520 = vmatmul.f32.gmra.mxu0 %v482
  %v521 = vpop.f32.mrf.mxu0
  %v522 = vadd.f32 0.0, %v521
  %523 = vdwg.mxu0
  %v524 = vsub.f32 %v502, %v464
  %v526 = vperm.slane %v480, 0
  %v528 = vmul.f32 %v526, %v524
  %v529 = vadd.f32 %v464, %v528
  %v530 = vsub.f32 %v522, %v478
  %v531 = vmul.f32 %v526, %v530
  %v532 = vadd.f32 %v478, %v531
  %v533 = vld [vmem:[%s9] sm:$0xff]
  %v534 = vld [vmem:[%s9 + $0x8] sm:$0xff]
  %v535 = vld [vmem:[%s12] sm:$0xff]
  %v536 = vld [vmem:[%s12 + $0x8] sm:$0xff]
  %v537 = vld [vmem:[%s12 + $0x10] sm:$0xff]
  %v538 = vld [vmem:[%s12 + $0x18] sm:$0xff]
  %v540 = vsel %vm58, %v448, 0
  %v543 = vsel %vm58, %v449, 0
  %v546 = vsel %vm58, %v458, 0
  %v549 = vsel %vm58, %v459, 0
  %551 = vmatpush.msra.mxu0 0.0
  %552 = vmatpush.msra.mxu0 0.0
  %553 = vmatpush.msra.mxu0 0.0
  %554 = vmatpush.msra.mxu0 0.0
  %555 = vmatpush.msra.mxu0 0.0
  %556 = vmatpush.msra.mxu0 0.0
  %557 = vmatpush.msra.mxu0 0.0
  %558 = vmatpush.msra.mxu0 0.0
  %559 = vmatpush.msra.mxu0 0.0
  %560 = vmatpush.msra.mxu0 0.0
  %561 = vmatpush.msra.mxu0 0.0
  %562 = vmatpush.msra.mxu0 0.0
  %563 = vmatpush.msra.mxu0 %v538
  %564 = vmatpush.msra.mxu0 %v537
  %565 = vmatpush.msra.mxu0 %v536
  %566 = vmatpush.msra.mxu0 %v535
  %567 = vmatmul.f32.gmra.mxu0 %v540
  %v568 = vpop.f32.mrf.mxu0
  %v569 = vadd.f32 0.0, %v568
  %570 = vmatmul.f32.gmra.mxu0 %v543
  %v571 = vpop.f32.mrf.mxu0
  %v572 = vadd.f32 0.0, %v571
  %573 = vmatmul.f32.gmra.mxu0 %v546
  %v574 = vpop.f32.mrf.mxu0
  %v575 = vadd.f32 0.0, %v574
  %576 = vmatmul.f32.gmra.mxu0 %v549
  %v577 = vpop.f32.mrf.mxu0
  %v578 = vadd.f32 0.0, %v577
  %579 = vdwg.mxu0
  %v580 = vperm.slane %v529, 0
  %v581 = vmul.f32 %v580, %v533
  %v582 = vmul.f32 %v580, %v534
  %v583 = vmul.f32 %v581, 1.442695
  %v584 = vpow.pop %v583
  %v585 = vmul.f32 %v582, 1.442695
  %v586 = vpow.pop %v585
  %vm587 = vcmask 523264
  %588 = vst.msk [vmem:[#allocation2] sm:$0xff] %vm587, %v584
  %589 = vst.msk [vmem:[#allocation2 + $0x8] sm:$0xff] %vm587, %v586
  %v590 = vperm.slane %v532, 0
  %v591 = vmul.f32 %v569, %v590
  %v592 = vmul.f32 %v572, %v590
  %593 = vst.msk [vmem:[#allocation3] sm:$0xff] %vm587, %v591
  %594 = vst.msk [vmem:[#allocation3 + $0x8] sm:$0xff] %vm587, %v592
  %595 = vst.msk [vmem:[#allocation4] sm:$0xff] %vm587, %v575
  %596 = vst.msk [vmem:[#allocation4 + $0x8] sm:$0xff] %vm587, %v578
  %v597 = vld [vmem:[%s12 + $0x20] sm:$0xff]
  %v598 = vld [vmem:[%s12 + $0x28] sm:$0xff]
  %v599 = vld [vmem:[%s12 + $0x30] sm:$0xff]
  %v600 = vld [vmem:[%s12 + $0x38] sm:$0xff]
  %601 = vmatpush.msra.mxu0 0.0
  %602 = vmatpush.msra.mxu0 0.0
  %603 = vmatpush.msra.mxu0 0.0
  %604 = vmatpush.msra.mxu0 0.0
  %605 = vmatpush.msra.mxu0 0.0
  %606 = vmatpush.msra.mxu0 0.0
  %607 = vmatpush.msra.mxu0 0.0
  %608 = vmatpush.msra.mxu0 0.0
  %609 = vmatpush.msra.mxu0 0.0
  %610 = vmatpush.msra.mxu0 0.0
  %611 = vmatpush.msra.mxu0 0.0
  %612 = vmatpush.msra.mxu0 0.0
  %613 = vmatpush.msra.mxu0 %v600
  %614 = vmatpush.msra.mxu0 %v599
  %615 = vmatpush.msra.mxu0 %v598
  %616 = vmatpush.msra.mxu0 %v597
  %617 = vmatmul.f32.gmra.mxu0 %v540
  %v618 = vpop.f32.mrf.mxu0
  %v619 = vadd.f32 0.0, %v618
  %620 = vmatmul.f32.gmra.mxu0 %v543
  %v621 = vpop.f32.mrf.mxu0
  %v622 = vadd.f32 0.0, %v621
  %623 = vmatmul.f32.gmra.mxu0 %v546
  %v624 = vpop.f32.mrf.mxu0
  %v625 = vadd.f32 0.0, %v624
  %626 = vmatmul.f32.gmra.mxu0 %v549
  %v627 = vpop.f32.mrf.mxu0
  %v628 = vadd.f32 0.0, %v627
  %629 = vdwg.mxu0
  %v630 = vperm.slane %v529, 1
  %v631 = vmul.f32 %v630, %v533
  %v632 = vmul.f32 %v630, %v534
  %v633 = vmul.f32 %v631, 1.442695
  %v634 = vpow.pop %v633
  %v635 = vmul.f32 %v632, 1.442695
  %v636 = vpow.pop %v635
  %637 = vst.msk [vmem:[#allocation2 + $0x10] sm:$0xff] %vm587, %v634
  %638 = vst.msk [vmem:[#allocation2 + $0x18] sm:$0xff] %vm587, %v636
  %v639 = vperm.slane %v532, 1
  %v640 = vmul.f32 %v619, %v639
  %v641 = vmul.f32 %v622, %v639
  %642 = vst.msk [vmem:[#allocation3 + $0x10] sm:$0xff] %vm587, %v640
  %643 = vst.msk [vmem:[#allocation3 + $0x18] sm:$0xff] %vm587, %v641
  %644 = vst.msk [vmem:[#allocation4 + $0x10] sm:$0xff] %vm587, %v625
  %645 = vst.msk [vmem:[#allocation4 + $0x18] sm:$0xff] %vm587, %v628
  %v646 = vld [vmem:[%s12 + $0x40] sm:$0xff]
  %v647 = vld [vmem:[%s12 + $0x48] sm:$0xff]
  %v648 = vld [vmem:[%s12 + $0x50] sm:$0xff]
  %v649 = vld [vmem:[%s12 + $0x58] sm:$0xff]
  %650 = vmatpush.msra.mxu0 0.0
  %651 = vmatpush.msra.mxu0 0.0
  %652 = vmatpush.msra.mxu0 0.0
  %653 = vmatpush.msra.mxu0 0.0
  %654 = vmatpush.msra.mxu0 0.0
  %655 = vmatpush.msra.mxu0 0.0
  %656 = vmatpush.msra.mxu0 0.0
  %657 = vmatpush.msra.mxu0 0.0
  %658 = vmatpush.msra.mxu0 0.0
  %659 = vmatpush.msra.mxu0 0.0
  %660 = vmatpush.msra.mxu0 0.0
  %661 = vmatpush.msra.mxu0 0.0
  %662 = vmatpush.msra.mxu0 %v649
  %663 = vmatpush.msra.mxu0 %v648
  %664 = vmatpush.msra.mxu0 %v647
  %665 = vmatpush.msra.mxu0 %v646
  %666 = vmatmul.f32.gmra.mxu0 %v540
  %v667 = vpop.f32.mrf.mxu0
  %v668 = vadd.f32 0.0, %v667
  %669 = vmatmul.f32.gmra.mxu0 %v543
  %v670 = vpop.f32.mrf.mxu0
  %v671 = vadd.f32 0.0, %v670
  %672 = vmatmul.f32.gmra.mxu0 %v546
  %v673 = vpop.f32.mrf.mxu0
  %v674 = vadd.f32 0.0, %v673
  %675 = vmatmul.f32.gmra.mxu0 %v549
  %v676 = vpop.f32.mrf.mxu0
  %v677 = vadd.f32 0.0, %v676
  %678 = vdwg.mxu0
  %v679 = vperm.slane %v529, 2
  %v680 = vmul.f32 %v679, %v533
  %v681 = vmul.f32 %v679, %v534
  %v682 = vmul.f32 %v680, 1.442695
  %v683 = vpow.pop %v682
  %v684 = vmul.f32 %v681, 1.442695
  %v685 = vpow.pop %v684
  %686 = vst.msk [vmem:[#allocation2 + $0x20] sm:$0xff] %vm587, %v683
  %687 = vst.msk [vmem:[#allocation2 + $0x28] sm:$0xff] %vm587, %v685
  %v688 = vperm.slane %v532, 2
  %v689 = vmul.f32 %v668, %v688
  %v690 = vmul.f32 %v671, %v688
  %691 = vst.msk [vmem:[#allocation3 + $0x20] sm:$0xff] %vm587, %v689
  %692 = vst.msk [vmem:[#allocation3 + $0x28] sm:$0xff] %vm587, %v690
  %693 = vst.msk [vmem:[#allocation4 + $0x20] sm:$0xff] %vm587, %v674
  %694 = vst.msk [vmem:[#allocation4 + $0x28] sm:$0xff] %vm587, %v677
  %v695 = vld [vmem:[%s12 + $0x60] sm:$0xff]
  %v696 = vld [vmem:[%s12 + $0x68] sm:$0xff]
  %v697 = vld [vmem:[%s12 + $0x70] sm:$0xff]
  %v698 = vld [vmem:[%s12 + $0x78] sm:$0xff]
  %699 = vmatpush.msra.mxu0 0.0
  %700 = vmatpush.msra.mxu0 0.0
  %701 = vmatpush.msra.mxu0 0.0
  %702 = vmatpush.msra.mxu0 0.0
  %703 = vmatpush.msra.mxu0 0.0
  %704 = vmatpush.msra.mxu0 0.0
  %705 = vmatpush.msra.mxu0 0.0
  %706 = vmatpush.msra.mxu0 0.0
  %707 = vmatpush.msra.mxu0 0.0
  %708 = vmatpush.msra.mxu0 0.0
  %709 = vmatpush.msra.mxu0 0.0
  %710 = vmatpush.msra.mxu0 0.0
  %711 = vmatpush.msra.mxu0 %v698
  %712 = vmatpush.msra.mxu0 %v697
  %713 = vmatpush.msra.mxu0 %v696
  %714 = vmatpush.msra.mxu0 %v695
  %715 = vmatmul.f32.gmra.mxu0 %v540
  %v716 = vpop.f32.mrf.mxu0
  %v717 = vadd.f32 0.0, %v716
  %718 = vmatmul.f32.gmra.mxu0 %v543
  %v719 = vpop.f32.mrf.mxu0
  %v720 = vadd.f32 0.0, %v719
  %721 = vmatmul.f32.gmra.mxu0 %v546
  %v722 = vpop.f32.mrf.mxu0
  %v723 = vadd.f32 0.0, %v722
  %724 = vmatmul.f32.gmra.mxu0 %v549
  %v725 = vpop.f32.mrf.mxu0
  %v726 = vadd.f32 0.0, %v725
  %727 = vdwg.mxu0
  %v728 = vperm.slane %v529, 3
  %v729 = vmul.f32 %v728, %v533
  %v730 = vmul.f32 %v728, %v534
  %v731 = vmul.f32 %v729, 1.442695
  %v732 = vpow.pop %v731
  %v733 = vmul.f32 %v730, 1.442695
  %v734 = vpow.pop %v733
  %735 = vst.msk [vmem:[#allocation2 + $0x30] sm:$0xff] %vm587, %v732
  %736 = vst.msk [vmem:[#allocation2 + $0x38] sm:$0xff] %vm587, %v734
  %v737 = vperm.slane %v532, 3
  %v738 = vmul.f32 %v717, %v737
  %v739 = vmul.f32 %v720, %v737
  %740 = vst.msk [vmem:[#allocation3 + $0x30] sm:$0xff] %vm587, %v738
  %741 = vst.msk [vmem:[#allocation3 + $0x38] sm:$0xff] %vm587, %v739
  %742 = vst.msk [vmem:[#allocation4 + $0x30] sm:$0xff] %vm587, %v723
  %743 = vst.msk [vmem:[#allocation4 + $0x38] sm:$0xff] %vm587, %v726
  %v744 = vld [vmem:[%s12 + $0x80] sm:$0xff]
  %v745 = vld [vmem:[%s12 + $0x88] sm:$0xff]
  %v746 = vld [vmem:[%s12 + $0x90] sm:$0xff]
  %v747 = vld [vmem:[%s12 + $0x98] sm:$0xff]
  %748 = vmatpush.msra.mxu0 0.0
  %749 = vmatpush.msra.mxu0 0.0
  %750 = vmatpush.msra.mxu0 0.0
  %751 = vmatpush.msra.mxu0 0.0
  %752 = vmatpush.msra.mxu0 0.0
  %753 = vmatpush.msra.mxu0 0.0
  %754 = vmatpush.msra.mxu0 0.0
  %755 = vmatpush.msra.mxu0 0.0
  %756 = vmatpush.msra.mxu0 0.0
  %757 = vmatpush.msra.mxu0 0.0
  %758 = vmatpush.msra.mxu0 0.0
  %759 = vmatpush.msra.mxu0 0.0
  %760 = vmatpush.msra.mxu0 %v747
  %761 = vmatpush.msra.mxu0 %v746
  %762 = vmatpush.msra.mxu0 %v745
  %763 = vmatpush.msra.mxu0 %v744
  %764 = vmatmul.f32.gmra.mxu0 %v540
  %v765 = vpop.f32.mrf.mxu0
  %v766 = vadd.f32 0.0, %v765
  %767 = vmatmul.f32.gmra.mxu0 %v543
  %v768 = vpop.f32.mrf.mxu0
  %v769 = vadd.f32 0.0, %v768
  %770 = vmatmul.f32.gmra.mxu0 %v546
  %v771 = vpop.f32.mrf.mxu0
  %v772 = vadd.f32 0.0, %v771
  %773 = vmatmul.f32.gmra.mxu0 %v549
  %v774 = vpop.f32.mrf.mxu0
  %v775 = vadd.f32 0.0, %v774
  %776 = vdwg.mxu0
  %v777 = vperm.slane %v529, 4
  %v778 = vmul.f32 %v777, %v533
  %v779 = vmul.f32 %v777, %v534
  %v780 = vmul.f32 %v778, 1.442695
  %v781 = vpow.pop %v780
  %v782 = vmul.f32 %v779, 1.442695
  %v783 = vpow.pop %v782
  %784 = vst.msk [vmem:[#allocation2 + $0x40] sm:$0xff] %vm587, %v781
  %785 = vst.msk [vmem:[#allocation2 + $0x48] sm:$0xff] %vm587, %v783
  %v786 = vperm.slane %v532, 4
  %v787 = vmul.f32 %v766, %v786
  %v788 = vmul.f32 %v769, %v786
  %789 = vst.msk [vmem:[#allocation3 + $0x40] sm:$0xff] %vm587, %v787
  %790 = vst.msk [vmem:[#allocation3 + $0x48] sm:$0xff] %vm587, %v788
  %791 = vst.msk [vmem:[#allocation4 + $0x40] sm:$0xff] %vm587, %v772
  %792 = vst.msk [vmem:[#allocation4 + $0x48] sm:$0xff] %vm587, %v775
  %v793 = vld [vmem:[%s12 + $0xa0] sm:$0xff]
  %v794 = vld [vmem:[%s12 + $0xa8] sm:$0xff]
  %v795 = vld [vmem:[%s12 + $0xb0] sm:$0xff]
  %v796 = vld [vmem:[%s12 + $0xb8] sm:$0xff]
  %797 = vmatpush.msra.mxu0 0.0
  %798 = vmatpush.msra.mxu0 0.0
  %799 = vmatpush.msra.mxu0 0.0
  %800 = vmatpush.msra.mxu0 0.0
  %801 = vmatpush.msra.mxu0 0.0
  %802 = vmatpush.msra.mxu0 0.0
  %803 = vmatpush.msra.mxu0 0.0
  %804 = vmatpush.msra.mxu0 0.0
  %805 = vmatpush.msra.mxu0 0.0
  %806 = vmatpush.msra.mxu0 0.0
  %807 = vmatpush.msra.mxu0 0.0
  %808 = vmatpush.msra.mxu0 0.0
  %809 = vmatpush.msra.mxu0 %v796
  %810 = vmatpush.msra.mxu0 %v795
  %811 = vmatpush.msra.mxu0 %v794
  %812 = vmatpush.msra.mxu0 %v793
  %813 = vmatmul.f32.gmra.mxu0 %v540
  %v814 = vpop.f32.mrf.mxu0
  %v815 = vadd.f32 0.0, %v814
  %816 = vmatmul.f32.gmra.mxu0 %v543
  %v817 = vpop.f32.mrf.mxu0
  %v818 = vadd.f32 0.0, %v817
  %819 = vmatmul.f32.gmra.mxu0 %v546
  %v820 = vpop.f32.mrf.mxu0
  %v821 = vadd.f32 0.0, %v820
  %822 = vmatmul.f32.gmra.mxu0 %v549
  %v823 = vpop.f32.mrf.mxu0
  %v824 = vadd.f32 0.0, %v823
  %825 = vdwg.mxu0
  %v826 = vperm.slane %v529, 5
  %v827 = vmul.f32 %v826, %v533
  %v828 = vmul.f32 %v826, %v534
  %v829 = vmul.f32 %v827, 1.442695
  %v830 = vpow.pop %v829
  %v831 = vmul.f32 %v828, 1.442695
  %v832 = vpow.pop %v831
  %833 = vst.msk [vmem:[#allocation2 + $0x50] sm:$0xff] %vm587, %v830
  %834 = vst.msk [vmem:[#allocation2 + $0x58] sm:$0xff] %vm587, %v832
  %v835 = vperm.slane %v532, 5
  %v836 = vmul.f32 %v815, %v835
  %v837 = vmul.f32 %v818, %v835
  %838 = vst.msk [vmem:[#allocation3 + $0x50] sm:$0xff] %vm587, %v836
  %839 = vst.msk [vmem:[#allocation3 + $0x58] sm:$0xff] %vm587, %v837
  %840 = vst.msk [vmem:[#allocation4 + $0x50] sm:$0xff] %vm587, %v821
  %841 = vst.msk [vmem:[#allocation4 + $0x58] sm:$0xff] %vm587, %v824
  %v842 = vld [vmem:[%s12 + $0xc0] sm:$0xff]
  %v843 = vld [vmem:[%s12 + $0xc8] sm:$0xff]
  %v844 = vld [vmem:[%s12 + $0xd0] sm:$0xff]
  %v845 = vld [vmem:[%s12 + $0xd8] sm:$0xff]
  %846 = vmatpush.msra.mxu0 0.0
  %847 = vmatpush.msra.mxu0 0.0
  %848 = vmatpush.msra.mxu0 0.0
  %849 = vmatpush.msra.mxu0 0.0
  %850 = vmatpush.msra.mxu0 0.0
  %851 = vmatpush.msra.mxu0 0.0
  %852 = vmatpush.msra.mxu0 0.0
  %853 = vmatpush.msra.mxu0 0.0
  %854 = vmatpush.msra.mxu0 0.0
  %855 = vmatpush.msra.mxu0 0.0
  %856 = vmatpush.msra.mxu0 0.0
  %857 = vmatpush.msra.mxu0 0.0
  %858 = vmatpush.msra.mxu0 %v845
  %859 = vmatpush.msra.mxu0 %v844
  %860 = vmatpush.msra.mxu0 %v843
  %861 = vmatpush.msra.mxu0 %v842
  %862 = vmatmul.f32.gmra.mxu0 %v540
  %v863 = vpop.f32.mrf.mxu0
  %v864 = vadd.f32 0.0, %v863
  %865 = vmatmul.f32.gmra.mxu0 %v543
  %v866 = vpop.f32.mrf.mxu0
  %v867 = vadd.f32 0.0, %v866
  %868 = vmatmul.f32.gmra.mxu0 %v546
  %v869 = vpop.f32.mrf.mxu0
  %v870 = vadd.f32 0.0, %v869
  %871 = vmatmul.f32.gmra.mxu0 %v549
  %v872 = vpop.f32.mrf.mxu0
  %v873 = vadd.f32 0.0, %v872
  %874 = vdwg.mxu0
  %v875 = vperm.slane %v529, 6
  %v876 = vmul.f32 %v875, %v533
  %v877 = vmul.f32 %v875, %v534
  %v878 = vmul.f32 %v876, 1.442695
  %v879 = vpow.pop %v878
  %v880 = vmul.f32 %v877, 1.442695
  %v881 = vpow.pop %v880
  %882 = vst.msk [vmem:[#allocation2 + $0x60] sm:$0xff] %vm587, %v879
  %883 = vst.msk [vmem:[#allocation2 + $0x68] sm:$0xff] %vm587, %v881
  %v884 = vperm.slane %v532, 6
  %v885 = vmul.f32 %v864, %v884
  %v886 = vmul.f32 %v867, %v884
  %887 = vst.msk [vmem:[#allocation3 + $0x60] sm:$0xff] %vm587, %v885
  %888 = vst.msk [vmem:[#allocation3 + $0x68] sm:$0xff] %vm587, %v886
  %889 = vst.msk [vmem:[#allocation4 + $0x60] sm:$0xff] %vm587, %v870
  %890 = vst.msk [vmem:[#allocation4 + $0x68] sm:$0xff] %vm587, %v873
  %v891 = vld [vmem:[%s12 + $0xe0] sm:$0xff]
  %v892 = vld [vmem:[%s12 + $0xe8] sm:$0xff]
  %v893 = vld [vmem:[%s12 + $0xf0] sm:$0xff]
  %v894 = vld [vmem:[%s12 + $0xf8] sm:$0xff]
  %895 = vmatpush.msra.mxu0 0.0
  %896 = vmatpush.msra.mxu0 0.0
  %897 = vmatpush.msra.mxu0 0.0
  %898 = vmatpush.msra.mxu0 0.0
  %899 = vmatpush.msra.mxu0 0.0
  %900 = vmatpush.msra.mxu0 0.0
  %901 = vmatpush.msra.mxu0 0.0
  %902 = vmatpush.msra.mxu0 0.0
  %903 = vmatpush.msra.mxu0 0.0
  %904 = vmatpush.msra.mxu0 0.0
  %905 = vmatpush.msra.mxu0 0.0
  %906 = vmatpush.msra.mxu0 0.0
  %907 = vmatpush.msra.mxu0 %v894
  %908 = vmatpush.msra.mxu0 %v893
  %909 = vmatpush.msra.mxu0 %v892
  %910 = vmatpush.msra.mxu0 %v891
  %911 = vmatmul.f32.gmra.mxu0 %v540
  %v912 = vpop.f32.mrf.mxu0
  %v913 = vadd.f32 0.0, %v912
  %914 = vmatmul.f32.gmra.mxu0 %v543
  %v915 = vpop.f32.mrf.mxu0
  %v916 = vadd.f32 0.0, %v915
  %917 = vmatmul.f32.gmra.mxu0 %v546
  %v918 = vpop.f32.mrf.mxu0
  %v919 = vadd.f32 0.0, %v918
  %920 = vmatmul.f32.gmra.mxu0 %v549
  %v921 = vpop.f32.mrf.mxu0
  %v922 = vadd.f32 0.0, %v921
  %923 = vdwg.mxu0
  %v924 = vperm.slane %v529, 7
  %v925 = vmul.f32 %v924, %v533
  %v926 = vmul.f32 %v924, %v534
  %v927 = vmul.f32 %v925, 1.442695
  %v928 = vpow.pop %v927
  %v929 = vmul.f32 %v926, 1.442695
  %v930 = vpow.pop %v929
  %931 = vst.msk [vmem:[#allocation2 + $0x70] sm:$0xff] %vm587, %v928
  %932 = vst.msk [vmem:[#allocation2 + $0x78] sm:$0xff] %vm587, %v930
  %v933 = vperm.slane %v532, 7
  %v934 = vmul.f32 %v913, %v933
  %v935 = vmul.f32 %v916, %v933
  %936 = vst.msk [vmem:[#allocation3 + $0x70] sm:$0xff] %vm587, %v934
  %937 = vst.msk [vmem:[#allocation3 + $0x78] sm:$0xff] %vm587, %v935
  %938 = vst.msk [vmem:[#allocation4 + $0x70] sm:$0xff] %vm587, %v919
  %939 = vst.msk [vmem:[#allocation4 + $0x78] sm:$0xff] %vm587, %v922
  %v940 = vld [vmem:[#allocation2] sm:$0xff]
  %v941 = vld [vmem:[#allocation2 + $0x8] sm:$0xff]
  %v942 = vmul.f32 %v940, 0.0
  %v943 = vmul.f32 %v941, 0.0
  %v944 = vld [vmem:[#allocation3] sm:$0xff]
  %v945 = vld [vmem:[#allocation3 + $0x8] sm:$0xff]
  %v946 = vadd.f32 %v942, %v944
  %v947 = vadd.f32 %v943, %v945
  %v948 = vld [vmem:[#allocation4] sm:$0xff]
  %v949 = vld [vmem:[#allocation4 + $0x8] sm:$0xff]
  %v950 = vmul.f32 %v946, %v948
  %v951 = vmul.f32 %v947, %v949
  %v952 = vsel %vm587, %v950, 0.0
  %v953 = vsel %vm587, %v951, 0.0
  %v954 = vadd.f32 %v952, %v953
  %v955 = vrot.slane %v954, 4
  %v956 = vadd.f32 %v954, %v955
  %v957 = vrot.slane %v956, 2
  %v958 = vadd.f32 %v956, %v957
  %v959 = vrot.slane %v958, 1
  %v960 = vadd.f32 %v958, %v959
  %v961 = vld [vmem:[#allocation2 + $0x10] sm:$0xff]
  %v962 = vld [vmem:[#allocation2 + $0x18] sm:$0xff]
  %v963 = vmul.f32 %v961, %v946
  %v964 = vmul.f32 %v962, %v947
  %v965 = vld [vmem:[#allocation3 + $0x10] sm:$0xff]
  %v966 = vld [vmem:[#allocation3 + $0x18] sm:$0xff]
  %v967 = vadd.f32 %v963, %v965
  %v968 = vadd.f32 %v964, %v966
  %v969 = vld [vmem:[#allocation4 + $0x10] sm:$0xff]
  %v970 = vld [vmem:[#allocation4 + $0x18] sm:$0xff]
  %v971 = vmul.f32 %v967, %v969
  %v972 = vmul.f32 %v968, %v970
  %v973 = vsel %vm587, %v971, 0.0
  %v974 = vsel %vm587, %v972, 0.0
  %v975 = vadd.f32 %v973, %v974
  %v976 = vrot.slane %v975, 4
  %v977 = vadd.f32 %v975, %v976
  %v978 = vrot.slane %v977, 2
  %v979 = vadd.f32 %v977, %v978
  %v980 = vrot.slane %v979, 1
  %v981 = vadd.f32 %v979, %v980
  %v982 = vld [vmem:[#allocation2 + $0x20] sm:$0xff]
  %v983 = vld [vmem:[#allocation2 + $0x28] sm:$0xff]
  %v984 = vmul.f32 %v982, %v967
  %v985 = vmul.f32 %v983, %v968
  %v986 = vld [vmem:[#allocation3 + $0x20] sm:$0xff]
  %v987 = vld [vmem:[#allocation3 + $0x28] sm:$0xff]
  %v988 = vadd.f32 %v984, %v986
  %v989 = vadd.f32 %v985, %v987
  %v990 = vld [vmem:[#allocation4 + $0x20] sm:$0xff]
  %v991 = vld [vmem:[#allocation4 + $0x28] sm:$0xff]
  %v992 = vmul.f32 %v988, %v990
  %v993 = vmul.f32 %v989, %v991
  %v994 = vsel %vm587, %v992, 0.0
  %v995 = vsel %vm587, %v993, 0.0
  %v996 = vadd.f32 %v994, %v995
  %v997 = vrot.slane %v996, 4
  %v998 = vadd.f32 %v996, %v997
  %v999 = vrot.slane %v998, 2
  %v1000 = vadd.f32 %v998, %v999
  %v1001 = vrot.slane %v1000, 1
  %v1002 = vadd.f32 %v1000, %v1001
  %v1003 = vld [vmem:[#allocation2 + $0x30] sm:$0xff]
  %v1004 = vld [vmem:[#allocation2 + $0x38] sm:$0xff]
  %v1005 = vmul.f32 %v1003, %v988
  %v1006 = vmul.f32 %v1004, %v989
  %v1007 = vld [vmem:[#allocation3 + $0x30] sm:$0xff]
  %v1008 = vld [vmem:[#allocation3 + $0x38] sm:$0xff]
  %v1009 = vadd.f32 %v1005, %v1007
  %v1010 = vadd.f32 %v1006, %v1008
  %v1011 = vld [vmem:[#allocation4 + $0x30] sm:$0xff]
  %v1012 = vld [vmem:[#allocation4 + $0x38] sm:$0xff]
  %v1013 = vmul.f32 %v1009, %v1011
  %v1014 = vmul.f32 %v1010, %v1012
  %v1015 = vsel %vm587, %v1013, 0.0
  %v1016 = vsel %vm587, %v1014, 0.0
  %v1017 = vadd.f32 %v1015, %v1016
  %v1018 = vrot.slane %v1017, 4
  %v1019 = vadd.f32 %v1017, %v1018
  %v1020 = vrot.slane %v1019, 2
  %v1021 = vadd.f32 %v1019, %v1020
  %v1022 = vrot.slane %v1021, 1
  %v1023 = vadd.f32 %v1021, %v1022
  %v1024 = vld [vmem:[#allocation2 + $0x40] sm:$0xff]
  %v1025 = vld [vmem:[#allocation2 + $0x48] sm:$0xff]
  %v1026 = vmul.f32 %v1024, %v1009
  %v1027 = vmul.f32 %v1025, %v1010
  %v1028 = vld [vmem:[#allocation3 + $0x40] sm:$0xff]
  %v1029 = vld [vmem:[#allocation3 + $0x48] sm:$0xff]
  %v1030 = vadd.f32 %v1026, %v1028
  %v1031 = vadd.f32 %v1027, %v1029
  %v1032 = vld [vmem:[#allocation4 + $0x40] sm:$0xff]
  %v1033 = vld [vmem:[#allocation4 + $0x48] sm:$0xff]
  %v1034 = vmul.f32 %v1030, %v1032
  %v1035 = vmul.f32 %v1031, %v1033
  %v1036 = vsel %vm587, %v1034, 0.0
  %v1037 = vsel %vm587, %v1035, 0.0
  %v1038 = vadd.f32 %v1036, %v1037
  %v1039 = vrot.slane %v1038, 4
  %v1040 = vadd.f32 %v1038, %v1039
  %v1041 = vrot.slane %v1040, 2
  %v1042 = vadd.f32 %v1040, %v1041
  %v1043 = vrot.slane %v1042, 1
  %v1044 = vadd.f32 %v1042, %v1043
  %v1045 = vld [vmem:[#allocation2 + $0x50] sm:$0xff]
  %v1046 = vld [vmem:[#allocation2 + $0x58] sm:$0xff]
  %v1047 = vmul.f32 %v1045, %v1030
  %v1048 = vmul.f32 %v1046, %v1031
  %v1049 = vld [vmem:[#allocation3 + $0x50] sm:$0xff]
  %v1050 = vld [vmem:[#allocation3 + $0x58] sm:$0xff]
  %v1051 = vadd.f32 %v1047, %v1049
  %v1052 = vadd.f32 %v1048, %v1050
  %v1053 = vld [vmem:[#allocation4 + $0x50] sm:$0xff]
  %v1054 = vld [vmem:[#allocation4 + $0x58] sm:$0xff]
  %v1055 = vmul.f32 %v1051, %v1053
  %v1056 = vmul.f32 %v1052, %v1054
  %v1057 = vsel %vm587, %v1055, 0.0
  %v1058 = vsel %vm587, %v1056, 0.0
  %v1059 = vadd.f32 %v1057, %v1058
  %v1060 = vrot.slane %v1059, 4
  %v1061 = vadd.f32 %v1059, %v1060
  %v1062 = vrot.slane %v1061, 2
  %v1063 = vadd.f32 %v1061, %v1062
  %v1064 = vrot.slane %v1063, 1
  %v1065 = vadd.f32 %v1063, %v1064
  %v1066 = vld [vmem:[#allocation2 + $0x60] sm:$0xff]
  %v1067 = vld [vmem:[#allocation2 + $0x68] sm:$0xff]
  %v1068 = vmul.f32 %v1066, %v1051
  %v1069 = vmul.f32 %v1067, %v1052
  %v1070 = vld [vmem:[#allocation3 + $0x60] sm:$0xff]
  %v1071 = vld [vmem:[#allocation3 + $0x68] sm:$0xff]
  %v1072 = vadd.f32 %v1068, %v1070
  %v1073 = vadd.f32 %v1069, %v1071
  %v1074 = vld [vmem:[#allocation4 + $0x60] sm:$0xff]
  %v1075 = vld [vmem:[#allocation4 + $0x68] sm:$0xff]
  %v1076 = vmul.f32 %v1072, %v1074
  %v1077 = vmul.f32 %v1073, %v1075
  %v1078 = vsel %vm587, %v1076, 0.0
  %v1079 = vsel %vm587, %v1077, 0.0
  %v1080 = vadd.f32 %v1078, %v1079
  %v1081 = vrot.slane %v1080, 4
  %v1082 = vadd.f32 %v1080, %v1081
  %v1083 = vrot.slane %v1082, 2
  %v1084 = vadd.f32 %v1082, %v1083
  %v1085 = vrot.slane %v1084, 1
  %v1086 = vadd.f32 %v1084, %v1085
  %v1087 = vld [vmem:[#allocation2 + $0x70] sm:$0xff]
  %v1088 = vld [vmem:[#allocation2 + $0x78] sm:$0xff]
  %v1089 = vmul.f32 %v1087, %v1072
  %v1090 = vmul.f32 %v1088, %v1073
  %v1091 = vld [vmem:[#allocation3 + $0x70] sm:$0xff]
  %v1092 = vld [vmem:[#allocation3 + $0x78] sm:$0xff]
  %v1093 = vadd.f32 %v1089, %v1091
  %v1094 = vadd.f32 %v1090, %v1092
  %v1095 = vld [vmem:[#allocation4 + $0x70] sm:$0xff]
  %v1096 = vld [vmem:[#allocation4 + $0x78] sm:$0xff]
  %v1097 = vmul.f32 %v1093, %v1095
  %v1098 = vmul.f32 %v1094, %v1096
  %v1099 = vsel %vm587, %v1097, 0.0
  %v1100 = vsel %vm587, %v1098, 0.0
  %v1101 = vadd.f32 %v1099, %v1100
  %v1102 = vrot.slane %v1101, 4
  %v1103 = vadd.f32 %v1101, %v1102
  %v1104 = vrot.slane %v1103, 2
  %v1105 = vadd.f32 %v1103, %v1104
  %v1106 = vrot.slane %v1105, 1
  %v1107 = vadd.f32 %v1105, %v1106
  %vm1108 = vcmask 1040384
  %v1109 = vsel %vm1108, %v960, %v981
  %vm1110 = vcmask 1041408
  %v1111 = vsel %vm1110, %v1109, %v1002
  %vm1112 = vcmask 1042432
  %v1113 = vsel %vm1112, %v1111, %v1023
  %vm1114 = vcmask 1043456
  %v1115 = vsel %vm1114, %v1113, %v1044
  %vm1116 = vcmask 1044480
  %v1117 = vsel %vm1116, %v1115, %v1065
  %vm1118 = vcmask 1045504
  %v1119 = vsel %vm1118, %v1117, %v1086
  %vm1120 = vcmask 1046528
  %v1121 = vsel %vm1120, %v1119, %v1107
  %1122 = vmatpush.msra.mxu0 0.0
  %1123 = vmatpush.msra.mxu0 0.0
  %1124 = vmatpush.msra.mxu0 0.0
  %1125 = vmatpush.msra.mxu0 0.0
  %1126 = vmatpush.msra.mxu0 0.0
  %1127 = vmatpush.msra.mxu0 0.0
  %1128 = vmatpush.msra.mxu0 0.0
  %1129 = vmatpush.msra.mxu0 0.0
  %1130 = vmatpush.msra.mxu0 0.0
  %1131 = vmatpush.msra.mxu0 0.0
  %1132 = vmatpush.msra.mxu0 0.0
  %1133 = vmatpush.msra.mxu0 0.0
  %1134 = vmatpush.msra.mxu0 0.0
  %1135 = vmatpush.msra.mxu0 0.0
  %1136 = vmatpush.msra.mxu0 0.0
  %1137 = vmatpush.msra.mxu0 %v1121
  %1138 = vmatmul.f32.gmra.mxu0 %v482
  %v1139 = vpop.f32.mrf.mxu0
  %v1140 = vadd.f32 0.0, %v1139
  %1141 = vdwg.mxu0
  %1143 = vrot.lane.b32.xlu0 %v1140, 112
  %v1144 = vpop.permute.xlu0 %1143
  %v1146 = vadd.f32 %v1121, %v1144
  %1148 = vrot.lane.b32.xlu0 %v1146, 96
  %v1149 = vpop.permute.xlu0 %1148
  %v1151 = vld [vmem:[%s13] sm:$0x1]
  %v1153 = vperm.slane %v1151, 0
  %v1155 = vmul.f32 %v1153, %v374
  %v1156 = vmul.f32 %v1153, %v377
  %v1157 = vadd.f32 %v1146, %v1155
  %v1158 = vadd.f32 %v1149, %v1156
  %v1159 = vsel %vm157, %v1157, 0.0
  %1160 = vadd.xlane.f32.xlu0 %v1159
  %v1161 = vpop.xlane.xlu0 %1160
  %v1162 = vsel %vm157, %v1158, 0.0
  %1163 = vadd.xlane.f32.xlu0 %v1162
  %v1164 = vpop.xlane.xlu0 %1163
  %v1165 = vrcp.pop 16.0
  %v1166 = vmul.f32 16.0, %v1165
  %v1167 = vsub.f32 1.0, %v1166
  %v1168 = vmul.f32 %v1165, %v1167
  %v1169 = vadd.f32 %v1165, %v1168
  %vm1170 = vweird.f32 %v1165
  %v1171 = vsel %vm1170, %v1165, %v1169
  %v1172 = vmul.f32 %v1161, %v1171
  %v1173 = vmul.f32 %v1164, %v1171
  %v1174 = vsub.f32 %v1157, %v1172
  %v1175 = vsub.f32 %v1158, %v1173
  %v1176 = vmul.f32 %v1174, %v1174
  %v1177 = vmul.f32 %v1175, %v1175
  %v1178 = vsel %vm157, %v1176, 0.0
  %1179 = vadd.xlane.f32.xlu0 %v1178
  %v1180 = vpop.xlane.xlu0 %1179
  %v1181 = vsel %vm157, %v1177, 0.0
  %1182 = vadd.xlane.f32.xlu0 %v1181
  %v1183 = vpop.xlane.xlu0 %1182
  %v1184 = vmul.f32 %v1180, %v1171
  %v1185 = vmul.f32 %v1183, %v1171
  %v1186 = vadd.f32 %v1184, 1e-05
  %v1187 = vadd.f32 %v1185, 1e-05
  %v1188 = vrsqrt.pop %v1186
  %v1189 = vmul.f32 %v1188, %v1186
  %v1190 = vmul.f32 %v1189, %v1188
  %v1191 = vmul.f32 0.5, %v1190
  %v1192 = vsub.f32 1.5, %v1191
  %v1193 = vmul.f32 %v1188, %v1192
  %vm1194 = vweird.f32 %v1186
  %vm1195 = vweird.f32 %v1188
  %vm1196 = vmor %vm1194, %vm1195
  %v1197 = vsel %vm1196, %v1188, %v1193
  %v1198 = vrsqrt.pop %v1187
  %v1199 = vmul.f32 %v1198, %v1187
  %v1200 = vmul.f32 %v1199, %v1198
  %v1201 = vmul.f32 0.5, %v1200
  %v1202 = vsub.f32 1.5, %v1201
  %v1203 = vmul.f32 %v1198, %v1202
  %vm1204 = vweird.f32 %v1187
  %vm1205 = vweird.f32 %v1198
  %vm1206 = vmor %vm1204, %vm1205
  %v1207 = vsel %vm1206, %v1198, %v1203
  %v1208 = vmul.f32 %v1174, %v1197
  %v1209 = vmul.f32 %v1175, %v1207
  %v1210 = vld [vmem:[%s14] sm:$0x1]
  %v1212 = vperm.slane %v1210, 0
  %v1214 = vmul.f32 %v1208, %v1212
  %v1215 = vmul.f32 %v1209, %v1212
  %v1216 = vld [vmem:[%s15] sm:$0x1]
  %v1218 = vperm.slane %v1216, 0
  %v1220 = vadd.f32 %v1214, %v1218
  %v1221 = vadd.f32 %v1215, %v1218
  %v1222 = vxor.u32 %v150, 2147483648
  %v1223 = vxor.u32 %v153, 2147483648
  %v1224 = vmul.f32 %v1222, 1.442695
  %v1225 = vpow.pop %v1224
  %v1226 = vmul.f32 %v1223, 1.442695
  %v1227 = vpow.pop %v1226
  %v1228 = vadd.f32 %v1225, 1.0
  %v1229 = vadd.f32 %v1227, 1.0
  %v1230 = vrcp.pop %v1228
  %v1231 = vmul.f32 %v1228, %v1230
  %v1232 = vsub.f32 1.0, %v1231
  %v1233 = vmul.f32 %v1230, %v1232
  %v1234 = vadd.f32 %v1230, %v1233
  %vm1235 = vweird.f32 %v1228
  %vm1236 = vweird.f32 %v1230
  %vm1237 = vmor %vm1235, %vm1236
  %v1238 = vsel %vm1237, %v1230, %v1234
  %v1239 = vand.u32 2147483647, %v1228
  %vm1240 = vcmp.eq.f32.partialorder %v1239, 8.507059e+37
  %v1241 = vand.u32 %v1228, 2147483648
  %v1242 = vor.u32 1.1754944e-38, %v1241
  %v1243 = vsel %vm1240, %v1242, %v1238
  %v1244 = vmul.f32 1.0, %v1243
  %v1245 = vrcp.pop %v1229
  %v1246 = vmul.f32 %v1229, %v1245
  %v1247 = vsub.f32 1.0, %v1246
  %v1248 = vmul.f32 %v1245, %v1247
  %v1249 = vadd.f32 %v1245, %v1248
  %vm1250 = vweird.f32 %v1229
  %vm1251 = vweird.f32 %v1245
  %vm1252 = vmor %vm1250, %vm1251
  %v1253 = vsel %vm1252, %v1245, %v1249
  %v1254 = vand.u32 2147483647, %v1229
  %vm1255 = vcmp.eq.f32.partialorder %v1254, 8.507059e+37
  %v1256 = vand.u32 %v1229, 2147483648
  %v1257 = vor.u32 1.1754944e-38, %v1256
  %v1258 = vsel %vm1255, %v1257, %v1253
  %v1259 = vmul.f32 1.0, %v1258
  %v1260 = vmul.f32 %v150, %v1244
  %v1261 = vmul.f32 %v153, %v1259
  %1264 = vrot.lane.b32.xlu0 %v1260, 112
  %v1265 = vpop.permute.xlu0 %1264
  %1266 = vrot.lane.b32.xlu0 %v1261, 112
  %v1267 = vpop.permute.xlu0 %1266
  %v1270 = vmul.f32 %v1220, %v1265
  %v1271 = vmul.f32 %v1221, %v1267
  %v1272 = vld [vmem:[%s16] sm:$0xff]
  %v1273 = vld [vmem:[%s16 + $0x8] sm:$0xff]
  %v1275 = vsel %vm157, %v1270, 0
  %v1278 = vsel %vm157, %v1271, 0
  %1280 = vmatpush.msra.mxu0 0.0
  %1281 = vmatpush.msra.mxu0 0.0
  %1282 = vmatpush.msra.mxu0 0.0
  %1283 = vmatpush.msra.mxu0 0.0
  %1284 = vmatpush.msra.mxu0 0.0
  %1285 = vmatpush.msra.mxu0 0.0
  %1286 = vmatpush.msra.mxu0 0.0
  %1287 = vmatpush.msra.mxu0 0.0
  %1288 = vmatpush.msra.mxu0 0.0
  %1289 = vmatpush.msra.mxu0 0.0
  %1290 = vmatpush.msra.mxu0 0.0
  %1291 = vmatpush.msra.mxu0 0.0
  %1292 = vmatpush.msra.mxu0 0.0
  %1293 = vmatpush.msra.mxu0 0.0
  %1294 = vmatpush.msra.mxu0 %v1273
  %1295 = vmatpush.msra.mxu0 %v1272
  %1296 = vmatmul.f32.gmra.mxu0 %v1275
  %v1297 = vpop.f32.mrf.mxu0
  %v1298 = vadd.f32 %v56, %v1297
  %1299 = vmatmul.f32.gmra.mxu0 %v1278
  %v1300 = vpop.f32.mrf.mxu0
  %v1301 = vadd.f32 %v57, %v1300
  %1302 = vdwg.mxu0
  %1303 = vst.msk [vmem:[%s17] sm:$0xff] %vm58, %v1298
  %1304 = vst.msk [vmem:[%s17 + $0x8] sm:$0xff] %vm58, %v1301
  // Predicated region
  $region70: #{spec_mamba_block_forward.1} parent=0 // pred_check
    _
  $region71: #{spec_mamba_block_forward.1} parent=0 // pred_check_branch
    %1306 = sbr.rel (0) target = $region73
  $region72: #{spec_mamba_block_forward.1} parent=0 // pred_region
    _
  $region73: #{spec_mamba_block_forward.1} parent=0 // pred_fallthru
    _
  // Predicated region
  $region74: #{spec_mamba_block_forward.1} parent=0 // pred_check
    _
  $region75: #{spec_mamba_block_forward.1} parent=0 // pred_check_branch
    %1308 = sbr.rel (0) target = $region77
  $region76: #{spec_mamba_block_forward.1} parent=0 // pred_region
    _
  $region77: #{spec_mamba_block_forward.1} parent=0 // pred_fallthru
    _

</llo_original>
